<compile_context>
chip_gen: v5e
topology: v5e:2x2
jax: 0.10.0
libtpu: 0.0.40
codegen_flags: <defaults>
</compile_context>

<pallas_src>
import jax
import jax.numpy as jnp
from jax.experimental import pallas as pl
from jax.experimental.pallas import tpu as pltpu

LANE = 128            # lane width / feature padding
DEFAULT_TILE_N = 512  # node tile target (rows of A / contraction); clamped below


def _round_up(x, m):
    return ((x + m - 1) // m) * m


def pick_node_tile(num_nodes, target=DEFAULT_TILE_N):
    """Largest multiple of 128 that divides the 128-padded node count, <= target."""
    n128 = _round_up(num_nodes, LANE)
    t = min(target, n128)
    t = (t // LANE) * LANE
    while n128 % t != 0:
        t -= LANE
    return max(t, LANE)


# ---------------------------------------------------------------------------
# Pallas kernels
# ---------------------------------------------------------------------------
def _gcn_layer_kernel(ktile_ref, kcnt_ref, a_ref, x_ref, w_ref, scale_ref,
                      shift_ref, o_ref, acc_ref):
    """Fused GCN layer row tile: Z[i] = ReLU(((sum_k A[i,k] @ X[k]) @ W)*s + t).

    The k axis only visits the scalar-prefetched non-zero column tiles of the
    block-diagonal batched-graph adjacency; out-of-band steps are gated off.
    """
    i = pl.program_id(0)
    k = pl.program_id(1)

    @pl.when(k == 0)
    def _():
        acc_ref[...] = jnp.zeros_like(acc_ref)

    # Accumulate A[i, kt[i,k]] @ X[kt[i,k]] in f32, only for in-band tiles.
    @pl.when(k < kcnt_ref[i])
    def _():
        acc_ref[...] += jnp.dot(a_ref[...], x_ref[...],
                                preferred_element_type=jnp.float32)

    @pl.when(k == pl.num_programs(1) - 1)
    def _():
        # Epilogue: (A@X) @ W in f32, fused (bias+BN) affine, ReLU.
        # Dropout(p=0.1) is identity in inference mode.
        h = jnp.dot(acc_ref[...], w_ref[...].astype(jnp.float32),
                    preferred_element_type=jnp.float32)
        h = h * scale_ref[...] + shift_ref[...]
        o_ref[...] = jnp.maximum(h, 0.0).astype(o_ref.dtype)


def _pool_kernel(p_ref, x_ref, o_ref, acc_ref):
    # global_mean_pool: out = sum_k P[:, k-tile] @ X[k-tile, :]
    k = pl.program_id(0)

    @pl.when(k == 0)
    def _():
        acc_ref[...] = jnp.zeros_like(acc_ref)

    acc_ref[...] += jnp.dot(p_ref[...], x_ref[...],
                            preferred_element_type=jnp.float32)

    @pl.when(k == pl.num_programs(0) - 1)
    def _():
        o_ref[...] = acc_ref[...]


# ---------------------------------------------------------------------------
# Wrappers (pallas_call with tiled BlockSpecs + scalar-prefetched schedule)
# ---------------------------------------------------------------------------
def gcn_layer(a_hat, h, w, scale, shift, ktiles, kcounts, max_k, *, tm, tk):
    n = a_hat.shape[0]
    f_in, f_out = w.shape
    n_row_tiles = n // tm

    grid_spec = pltpu.PrefetchScalarGridSpec(
        num_scalar_prefetch=2,
        grid=(n_row_tiles, max_k),
        in_specs=[
            # A_hat row tile, data-dependent column tile (band schedule).
            pl.BlockSpec((tm, tk), lambda i, k, kt, kc: (i, kt[i * max_k + k])),
            # Matching X row tile.
            pl.BlockSpec((tk, f_in), lambda i, k, kt, kc: (kt[i * max_k + k], 0)),
            # Weight + folded BN affine (small, resident).
            pl.BlockSpec((f_in, f_out), lambda i, k, kt, kc: (0, 0)),
            pl.BlockSpec((1, f_out), lambda i, k, kt, kc: (0, 0)),
            pl.BlockSpec((1, f_out), lambda i, k, kt, kc: (0, 0)),
        ],
        out_specs=pl.BlockSpec((tm, f_out), lambda i, k, kt, kc: (i, 0)),
        scratch_shapes=[pltpu.VMEM((tm, f_in), jnp.float32)],
    )

    flops = 2 * n * max_k * tk * f_in + 2 * n * f_in * f_out
    bytes_accessed = (n * max_k * tk * 2 + n * f_in * 2 + f_in * f_out * 2
                      + n * f_out * 2 + 8 * f_out)
    return pl.pallas_call(
        _gcn_layer_kernel,
        grid_spec=grid_spec,
        out_shape=jax.ShapeDtypeStruct((n, f_out), jnp.bfloat16),
        compiler_params=pltpu.CompilerParams(
            # Row axis parallel -> the 2 TensorCores on v7x split it.
            dimension_semantics=("parallel", "arbitrary")),
        cost_estimate=pl.CostEstimate(flops=flops, transcendentals=0,
                                      bytes_accessed=bytes_accessed),
    )(ktiles, kcounts, a_hat, h, w, scale, shift)


def global_mean_pool_pallas(pool_mat, h, *, tk):
    g = pool_mat.shape[0]
    n, f = h.shape
    return pl.pallas_call(
        _pool_kernel,
        out_shape=jax.ShapeDtypeStruct((g, f), jnp.float32),
        grid=(n // tk,),
        in_specs=[
            pl.BlockSpec((g, tk), lambda k: (0, k)),
            pl.BlockSpec((tk, f), lambda k: (k, 0)),
        ],
        out_specs=pl.BlockSpec((g, f), lambda k: (0, 0)),
        scratch_shapes=[pltpu.VMEM((g, f), jnp.float32)],
        compiler_params=pltpu.CompilerParams(
            dimension_semantics=("arbitrary",)),
    )(pool_mat, h)


def ugcnn_forward(params, x_pad, a_hat, pool_mat, ktiles, kcounts, max_k, *, tm, tk):
    h = x_pad
    for (w, scale, shift) in params:
        h = gcn_layer(a_hat, h, w, scale, shift, ktiles, kcounts, max_k,
                      tm=tm, tk=tk)
    return global_mean_pool_pallas(pool_mat, h, tk=tk)


# ---------------------------------------------------------------------------
# Glue: parameter init, graph preprocessing (plain JAX / Python, host side)
# ---------------------------------------------------------------------------
def init_ugcnn_params(key, hidden_dims, input_dim, out_channels):
    dims = [input_dim] + list(hidden_dims) + [out_channels]
    dims_pad = [_round_up(d, LANE) for d in dims]
    params = []
    eps = 1e-5
    for i in range(len(dims) - 1):
        key, kw, kg, kb = jax.random.split(key, 4)
        fan_in, fan_out = dims[i], dims[i + 1]
        # GCNConv default: glorot weight, zero bias.
        limit = (6.0 / (fan_in + fan_out)) ** 0.5
        w = jax.random.uniform(kw, (fan_in, fan_out), jnp.float32, -limit, limit)
        b = jnp.zeros((fan_out,), jnp.float32)
        # BatchNorm affine params (deterministic, non-trivial); fresh running stats.
        gamma = jax.random.uniform(kg, (fan_out,), jnp.float32, 0.5, 1.5)
        beta = jax.random.uniform(kb, (fan_out,), jnp.float32, -0.5, 0.5)
        running_mean = jnp.zeros((fan_out,), jnp.float32)
        running_var = jnp.ones((fan_out,), jnp.float32)
        scale = gamma / jnp.sqrt(running_var + eps)
        # GCN bias pre-folded into the BN shift: (x + b)*s + t == x*s + (b*s + t).
        shift = (beta - running_mean * scale) + b * scale
        # Lane-pad to 128; zero padding keeps padded channels exactly 0 through
        # the matmul chain (ReLU(0*s + 0) = 0 on padded channels).
        w_p = jnp.zeros((dims_pad[i], dims_pad[i + 1]), jnp.float32)
        w_p = w_p.at[:fan_in, :fan_out].set(w)
        s_p = jnp.zeros((1, dims_pad[i + 1]), jnp.float32).at[0, :fan_out].set(scale)
        t_p = jnp.zeros((1, dims_pad[i + 1]), jnp.float32).at[0, :fan_out].set(shift)
        params.append((w_p.astype(jnp.bfloat16), s_p, t_p))
    return params


def build_gcn_norm_adj(edge_index, num_nodes, num_nodes_pad):
    """Dense D^-1/2 (A + I) D^-1/2 matching torch_geometric gcn_norm, zero-padded."""
    src, dst = edge_index[0], edge_index[1]
    adj = jnp.zeros((num_nodes, num_nodes), jnp.float32)
    adj = adj.at[dst, src].add(1.0)                     # A[dst, src] (scatter_add)
    adj = adj + jnp.eye(num_nodes, dtype=jnp.float32)   # add self-loops
    deg = adj.sum(axis=1)                               # degree (incl. self-loop)
    dis = jnp.where(deg > 0, 1.0 / jnp.sqrt(deg), 0.0)
    a = dis[:, None] * adj * dis[None, :]
    a_pad = jnp.zeros((num_nodes_pad, num_nodes_pad), jnp.float32)
    a_pad = a_pad.at[:num_nodes, :num_nodes].set(a)
    return a_pad.astype(jnp.bfloat16)


def build_pool_matrix(batch, num_graphs, num_graphs_pad, num_nodes_pad):
    """(G_pad, N_pad) matrix P with P[g, n] = 1/|graph g| if batch[n] == g else 0."""
    num_nodes = batch.shape[0]
    onehot = (batch[None, :] == jnp.arange(num_graphs)[:, None]).astype(jnp.float32)
    counts = onehot.sum(axis=1, keepdims=True)
    p = onehot / jnp.maximum(counts, 1.0)
    p_pad = jnp.zeros((num_graphs_pad, num_nodes_pad), jnp.float32)
    p_pad = p_pad.at[:num_graphs, :num_nodes].set(p)
    return p_pad.astype(jnp.bfloat16)


def build_block_schedule(batch, num_nodes, n_pad, tm, tk):
    """Per-row-tile band of non-zero A_hat column tiles (block-diagonal batching).

    Assumes nodes of each graph are contiguous (torch_geometric batching).
    Returns (ktiles_flat, kcounts, max_k): ktiles_flat[i*max_k + k] is the k-th
    non-zero column tile for row tile i (padded by repeating the last valid tile
    so consecutive identical block indices skip the DMA); kcounts[i] gates the
    in-kernel accumulation.  Fully padded row tiles get count 0.
    """
    batch = [int(g) for g in batch]
    first, last = {}, {}
    for idx, g in enumerate(batch):
        if g not in first:
            first[g] = idx
        last[g] = idx

    n_row_tiles = n_pad // tm
    bands = []
    for i in range(n_row_tiles):
        r0 = i * tm
        r1 = min((i + 1) * tm, num_nodes) - 1
        if r0 >= num_nodes:
            bands.append((0, -1))            # pure padding tile -> empty band
            continue
        c0 = first[batch[r0]]
        c1 = last[batch[r1]]
        bands.append((c0 // tk, c1 // tk))

    counts = [max(hi - lo + 1, 0) for lo, hi in bands]
    max_k = max(max(counts), 1)
    ktiles = []
    for (lo, _), cnt in zip(bands, counts):
        row = [lo + j for j in range(cnt)]
        pad_val = row[-1] if row else 0
        row = row + [pad_val] * (max_k - cnt)
        ktiles += row
    return (jnp.asarray(ktiles, jnp.int32),
            jnp.asarray(counts, jnp.int32),
            max_k)


# ---------------------------------------------------------------------------
# Pure-JAX reference (f32) for correctness check
# ---------------------------------------------------------------------------
def ugcnn_reference(params, x_pad, a_hat, pool_mat):
    h = x_pad.astype(jnp.float32)
    a = a_hat.astype(jnp.float32)
    for (w, scale, shift) in params:
        h = jnp.maximum((a @ (h @ w.astype(jnp.float32))) * scale + shift, 0.0)
    return pool_mat.astype(jnp.float32) @ h


# ---------------------------------------------------------------------------
# Demo
# ---------------------------------------------------------------------------
if __name__ == "__main__":
    key = jax.random.PRNGKey(0)

    input_dim = 8
    hidden_dims = [32, 32]
    out_channels = 16

    # Batched graph: 3 ring graphs x 100 nodes, contiguous node ordering
    # (torch_geometric-style batching => block-diagonal A_hat).
    graph_sizes = [100, 100, 100]
    num_graphs = len(graph_sizes)
    num_nodes = sum(graph_sizes)

    src_list, dst_list, batch_list = [], [], []
    base = 0
    for g, sz in enumerate(graph_sizes):
        for j in range(sz):
            a = base + j
            b = base + (j + 1) % sz
            src_list += [a, b]
            dst_list += [b, a]
        batch_list += [g] * sz
        base += sz
    edge_index = jnp.array([src_list, dst_list], dtype=jnp.int32)

    key, kx = jax.random.split(key)
    x = jax.random.normal(kx, (num_nodes, input_dim), jnp.float32)

    params = init_ugcnn_params(key, hidden_dims, input_dim, out_channels)

    def run(tile_n):
        n_pad = _round_up(num_nodes, tile_n)
        g_pad = _round_up(num_graphs, 8)
        f_in_pad = _round_up(input_dim, LANE)

        x_pad = jnp.zeros((n_pad, f_in_pad), jnp.float32)
        x_pad = x_pad.at[:num_nodes, :input_dim].set(x).astype(jnp.bfloat16)
        a_hat = build_gcn_norm_adj(edge_index, num_nodes, n_pad)
        pool_mat = build_pool_matrix(jnp.asarray(batch_list, jnp.int32),
                                     num_graphs, g_pad, n_pad)
        ktiles, kcounts, max_k = build_block_schedule(
            batch_list, num_nodes, n_pad, tile_n, tile_n)

        out_pad = ugcnn_forward(params, x_pad, a_hat, pool_mat,
                                ktiles, kcounts, max_k, tm=tile_n, tk=tile_n)
        out_pad = jax.block_until_ready(out_pad)
        ref = ugcnn_reference(params, x_pad, a_hat, pool_mat)
        return (out_pad[:num_graphs, :out_channels],
                ref[:num_graphs, :out_channels])

    # Config A: large tile (default path; single tile at this small size).
    out_a, ref_a = run(pick_node_tile(num_nodes))
    # Config B: 128 tiles so the multi-tile band-skip path is exercised.
    out_b, ref_b = run(128)

    for out, ref in ((out_a, ref_a), (out_b, ref_b)):
        assert out.shape == (num_graphs, out_channels)
        assert bool(jnp.all(jnp.isfinite(out)))
        assert bool(jnp.allclose(out, ref, atol=1e-1, rtol=1e-1))
    print("KERNEL_OK")
</pallas_src>

<mosaic_0001>
module attributes {stable_mosaic.version = 11 : i64} {
  func.func @_gcn_layer_kernel(%arg0: i32, %arg1: i32, %arg2: memref<1xi32, #tpu.memory_space<smem>>, %arg3: memref<1xi32, #tpu.memory_space<smem>>, %arg4: memref<384x384xbf16, #tpu.memory_space<vmem>>, %arg5: memref<384x128xbf16, #tpu.memory_space<vmem>>, %arg6: memref<128x128xbf16, #tpu.memory_space<vmem>>, %arg7: memref<1x128xf32, #tpu.memory_space<vmem>>, %arg8: memref<1x128xf32, #tpu.memory_space<vmem>>, %arg9: memref<384x128xbf16, #tpu.memory_space<vmem>>, %arg10: memref<384x128xf32, #tpu.memory_space<vmem>>) attributes {dimension_semantics = [#tpu.dimension_semantics<parallel>, #tpu.dimension_semantics<arbitrary>], iteration_bounds = array<i64: 1, 1>, scalar_prefetch = 2 : i64, scratch_operands = 1 : i64, tpu.core_type = #tpu.core_type<tc>, window_params = [{transform_indices = @transform_0, window_bounds = array<i64: 384, 384>}, {transform_indices = @transform_1, window_bounds = array<i64: 384, 128>}, {pipeline_mode = #tpu.pipeline_mode<synchronous>, transform_indices = @transform_2, window_bounds = array<i64: 128, 128>}, {pipeline_mode = #tpu.pipeline_mode<synchronous>, transform_indices = @transform_3, window_bounds = array<i64: 1, 128>}, {pipeline_mode = #tpu.pipeline_mode<synchronous>, transform_indices = @transform_4, window_bounds = array<i64: 1, 128>}, {transform_indices = @transform_5, window_bounds = array<i64: 384, 128>}]} {
    %c0_i32 = arith.constant 0 : i32
    %0 = arith.cmpi eq, %arg1, %c0_i32 : i32
    %1 = arith.extui %0 : i1 to i32
    %c0_i32_0 = arith.constant 0 : i32
    %2 = arith.cmpi ne, %1, %c0_i32_0 : i32
    scf.if %2 {
      %cst = arith.constant 0.000000e+00 : f32
      %11 = vector.broadcast %cst : f32 to vector<384x128xf32>
      %c0 = arith.constant 0 : index
      %c0_4 = arith.constant 0 : index
      %12 = vector.load %arg10[%c0, %c0_4] : memref<384x128xf32, #tpu.memory_space<vmem>>, vector<384x128xf32>
      tpu.vector_store %arg10[%c0, %c0_4], %11 {strides = array<i32>} : memref<384x128xf32, #tpu.memory_space<vmem>>, vector<384x128xf32>,
    } else {
    }
    %3 = arith.index_cast %arg0 : i32 to index
    %4 = memref.load %arg3[%3] : memref<1xi32, #tpu.memory_space<smem>>
    %5 = arith.cmpi slt, %arg1, %4 : i32
    %6 = arith.extui %5 : i1 to i32
    %c0_i32_1 = arith.constant 0 : i32
    %7 = arith.cmpi ne, %6, %c0_i32_1 : i32
    scf.if %7 {
      %c0 = arith.constant 0 : index
      %c0_4 = arith.constant 0 : index
      %11 = vector.load %arg10[%c0, %c0_4] : memref<384x128xf32, #tpu.memory_space<vmem>>, vector<384x128xf32>
      %c0_5 = arith.constant 0 : index
      %c0_6 = arith.constant 0 : index
      %12 = vector.load %arg4[%c0_5, %c0_6] : memref<384x384xbf16, #tpu.memory_space<vmem>>, vector<384x384xbf16>
      %c0_7 = arith.constant 0 : index
      %c0_8 = arith.constant 0 : index
      %13 = vector.load %arg5[%c0_7, %c0_8] : memref<384x128xbf16, #tpu.memory_space<vmem>>, vector<384x128xbf16>
      %cst = arith.constant dense<0.000000e+00> : vector<384x128xf32>
      %14 = tpu.matmul %12, %13, %cst {dimension_numbers = #tpu.dot_dimension_numbers<[1], [0], [0], [1], [0, 0, 1, 1], [], []>} : vector<384x384xbf16>, vector<384x128xbf16>, vector<384x128xf32> -> vector<384x128xf32>
      %15 = arith.addf %11, %14 : vector<384x128xf32>
      %c0_9 = arith.constant 0 : index
      %c0_10 = arith.constant 0 : index
      %16 = vector.load %arg10[%c0_9, %c0_10] : memref<384x128xf32, #tpu.memory_space<vmem>>, vector<384x128xf32>
      tpu.vector_store %arg10[%c0_9, %c0_10], %15 {strides = array<i32>} : memref<384x128xf32, #tpu.memory_space<vmem>>, vector<384x128xf32>,
    } else {
    }
    %c0_i32_2 = arith.constant 0 : i32
    %8 = arith.cmpi eq, %arg1, %c0_i32_2 : i32
    %9 = arith.extui %8 : i1 to i32
    %c0_i32_3 = arith.constant 0 : i32
    %10 = arith.cmpi ne, %9, %c0_i32_3 : i32
    scf.if %10 {
      %c0 = arith.constant 0 : index
      %c0_4 = arith.constant 0 : index
      %11 = vector.load %arg10[%c0, %c0_4] : memref<384x128xf32, #tpu.memory_space<vmem>>, vector<384x128xf32>
      %c0_5 = arith.constant 0 : index
      %c0_6 = arith.constant 0 : index
      %12 = vector.load %arg6[%c0_5, %c0_6] : memref<128x128xbf16, #tpu.memory_space<vmem>>, vector<128x128xbf16>
      %13 = arith.extf %12 : vector<128x128xbf16> to vector<128x128xf32>
      %cst = arith.constant dense<0.000000e+00> : vector<384x128xf32>
      %14 = tpu.matmul %11, %13, %cst {dimension_numbers = #tpu.dot_dimension_numbers<[1], [0], [0], [1], [0, 0, 1, 1], [], []>} : vector<384x128xf32>, vector<128x128xf32>, vector<384x128xf32> -> vector<384x128xf32>
      %c0_7 = arith.constant 0 : index
      %c0_8 = arith.constant 0 : index
      %15 = vector.load %arg7[%c0_7, %c0_8] : memref<1x128xf32, #tpu.memory_space<vmem>>, vector<1x128xf32>
      %16 = vector.broadcast %15 : vector<1x128xf32> to vector<384x128xf32>
      %17 = arith.mulf %14, %16 : vector<384x128xf32>
      %c0_9 = arith.constant 0 : index
      %c0_10 = arith.constant 0 : index
      %18 = vector.load %arg8[%c0_9, %c0_10] : memref<1x128xf32, #tpu.memory_space<vmem>>, vector<1x128xf32>
      %19 = vector.broadcast %18 : vector<1x128xf32> to vector<384x128xf32>
      %20 = arith.addf %17, %19 : vector<384x128xf32>
      %cst_11 = arith.constant 0.000000e+00 : f32
      %21 = vector.broadcast %cst_11 : f32 to vector<384x128xf32>
      %22 = arith.maximumf %20, %21 : vector<384x128xf32>
      %23 = arith.truncf %22 : vector<384x128xf32> to vector<384x128xbf16>
      %c0_12 = arith.constant 0 : index
      %c0_13 = arith.constant 0 : index
      %24 = vector.load %arg9[%c0_12, %c0_13] : memref<384x128xbf16, #tpu.memory_space<vmem>>, vector<384x128xbf16>
      tpu.vector_store %arg9[%c0_12, %c0_13], %23 {strides = array<i32>} : memref<384x128xbf16, #tpu.memory_space<vmem>>, vector<384x128xbf16>,
    } else {
    }
    return
  }
  func.func @transform_0(%arg0: i32, %arg1: i32, %arg2: memref<1xi32, #tpu.memory_space<smem>>, %arg3: memref<1xi32, #tpu.memory_space<smem>>) -> (i32, i32) {
    %c1_i32 = arith.constant 1 : i32
    %0 = arith.muli %arg0, %c1_i32 : i32
    %1 = arith.addi %0, %arg1 : i32
    %2 = arith.index_cast %1 : i32 to index
    %3 = memref.load %arg2[%2] : memref<1xi32, #tpu.memory_space<smem>>
    %c0_i32 = arith.constant 0 : i32
    return %arg0, %3 : i32, i32
  }
  func.func @transform_1(%arg0: i32, %arg1: i32, %arg2: memref<1xi32, #tpu.memory_space<smem>>, %arg3: memref<1xi32, #tpu.memory_space<smem>>) -> (i32, i32) {
    %c1_i32 = arith.constant 1 : i32
    %0 = arith.muli %arg0, %c1_i32 : i32
    %1 = arith.addi %0, %arg1 : i32
    %2 = arith.index_cast %1 : i32 to index
    %3 = memref.load %arg2[%2] : memref<1xi32, #tpu.memory_space<smem>>
    %c0_i32 = arith.constant 0 : i32
    %c0_i32_0 = arith.constant 0 : i32
    return %3, %c0_i32 : i32, i32
  }
  func.func @transform_2(%arg0: i32, %arg1: i32, %arg2: memref<1xi32, #tpu.memory_space<smem>>, %arg3: memref<1xi32, #tpu.memory_space<smem>>) -> (i32, i32) {
    %c0_i32 = arith.constant 0 : i32
    %c0_i32_0 = arith.constant 0 : i32
    %c0_i32_1 = arith.constant 0 : i32
    return %c0_i32, %c0_i32_0 : i32, i32
  }
  func.func @transform_3(%arg0: i32, %arg1: i32, %arg2: memref<1xi32, #tpu.memory_space<smem>>, %arg3: memref<1xi32, #tpu.memory_space<smem>>) -> (i32, i32) {
    %c0_i32 = arith.constant 0 : i32
    %c0_i32_0 = arith.constant 0 : i32
    %c0_i32_1 = arith.constant 0 : i32
    return %c0_i32, %c0_i32_0 : i32, i32
  }
  func.func @transform_4(%arg0: i32, %arg1: i32, %arg2: memref<1xi32, #tpu.memory_space<smem>>, %arg3: memref<1xi32, #tpu.memory_space<smem>>) -> (i32, i32) {
    %c0_i32 = arith.constant 0 : i32
    %c0_i32_0 = arith.constant 0 : i32
    %c0_i32_1 = arith.constant 0 : i32
    return %c0_i32, %c0_i32_0 : i32, i32
  }
  func.func @transform_5(%arg0: i32, %arg1: i32, %arg2: memref<1xi32, #tpu.memory_space<smem>>, %arg3: memref<1xi32, #tpu.memory_space<smem>>) -> (i32, i32) {
    %c0_i32 = arith.constant 0 : i32
    %c0_i32_0 = arith.constant 0 : i32
    return %arg0, %c0_i32 : i32, i32
  }
}

</mosaic_0001>

<llo_original>
// kernel: tpu_custom_call.1
$region0: #{tpu_custom_call.1}
  #allocation0 [shape = 'u32[]', space=smem, size = 0x4, offset = 0x4, fixed_abs, tag = 'smem constant byte address 0x4 - core index']
  #allocation1 [shape = 'u32[72,128]{1,0:T(1,128)}', space=vmem, size = 0x9000, scoped, tag = 'internal scratch']
  #allocation2 [shape = 'f32[384,128]{1,0:T(8,128)}', space=vmem, size = 0x30000, scoped, tag = 'scratch operand']
  #allocation3 [shape = 's32[1]{0}', space=sflag, size = 0x4, scoped, tag = 'scoped memory for tpu_custom_call.1']
  #allocation4 [shape = 's32[1]{0:T(128)S(6)}', space=smem, size = 0x200, scoped, tag = 'prefetched SMEM operand 0']
  #allocation5 [shape = 's32[1]{0:T(128)S(6)}', space=smem, size = 0x200, scoped, tag = 'prefetched SMEM operand 1']
  %s0 = inlined_call_operand.<no memory space> [shape: s32[1], index: 0, kind: input, shape index: {}]
  %s1 = inlined_call_operand.<no memory space> [shape: s32[1], index: 1, kind: input, shape index: {}]
  %s2 = inlined_call_operand.hbm [shape: bf16[384,384], index: 2, kind: input, shape index: {}]
  %s3 = inlined_call_operand.hbm [shape: bf16[384,128], index: 3, kind: input, shape index: {}]
  %s4 = inlined_call_operand.hbm [shape: bf16[128,128], index: 4, kind: input, shape index: {}]
  %s5 = inlined_call_operand.vmem [shape: f32[1,128], index: 5, kind: input, shape index: {}]
  %s6 = inlined_call_operand.vmem [shape: f32[1,128], index: 6, kind: input, shape index: {}]
  %s7 = inlined_call_operand.hbm [shape: bf16[384,128], index: 7, kind: output, shape index: {}]
  %s8 = sld [smem:[#allocation0]]
  $region54: #{tpu_custom_call.1} parent=0
    _
  %s10 = ssub.s32 1, %s8
  %s11 = scalar_select 0, %s10, %s8
  %12 = sst [smem:[#allocation4]] %s0
  %13 = sst [smem:[#allocation5]] %s1
  $region1: #{tpu_custom_call.1} parent=0
    #allocation6 [shape = 'u8[294912]{0}', space=vmem, size = 0x48000, scoped, tag = 'input window, operand 2, single buffered']
    #allocation7 [shape = 's32[1]{0}', space=sflag, size = 0x4, scoped, tag = 'scoped memory for tpu_custom_call.1']
    #allocation8 [shape = 's32[1]{0}', space=sflag, size = 0x4, scoped, tag = 'scoped memory for tpu_custom_call.1']
    #allocation9 [shape = 'u8[98304]{0}', space=vmem, size = 0x18000, scoped, tag = 'input window, operand 3, single buffered']
    #allocation10 [shape = 's32[1]{0}', space=sflag, size = 0x4, scoped, tag = 'scoped memory for tpu_custom_call.1']
    #allocation11 [shape = 'u8[32768]{0}', space=vmem, size = 0x8000, scoped, tag = 'input window, operand 4, single buffered']
    #allocation12 [shape = 'u8[98304]{0}', space=vmem, size = 0x18000, scoped, tag = 'output window, operand 0, single buffered']
    %14 = vsyncpa [#allocation7], 0
    %15 = vsyncpa [#allocation10], 0
    %16 = vsyncpa [#allocation8], 0
    // Predicated region
    $region2: #{tpu_custom_call.1} parent=1 // pred_check
      _
    $region3: #{tpu_custom_call.1} parent=1 // pred_check_branch
      %18 = sbr.rel (0) target = $region5
    $region4: #{tpu_custom_call.1} parent=1 // pred_region
      %s19 = sadd.s32 0, 0
      %s20 = sld [smem:[#allocation4 + %s19]]
      %s21 = smul.u32 3, %s20
      %23 = vsyncadd [#allocation7], 0
      %s24 = smul.addr %s21, 4
      %s25 = scalar_lea.hbm %s2, %s24
      %s26 = sshll.u32 %s25, 4
      %s27 = int_to_ptr.hbm [resolvable:$true] %s26
      %s28 = sshll.u32 [#allocation6], 4
      %s29 = int_to_ptr.vmem [resolvable:$true] %s28
      %34 = dma.hbm_to_vmem [thread:$0]  %s27, 9216, %s29, [#allocation7], 192, 192, 12
    $region5: #{tpu_custom_call.1} parent=1 // pred_fallthru
      _
    // Predicated region
    $region6: #{tpu_custom_call.1} parent=1 // pred_check
      _
    $region7: #{tpu_custom_call.1} parent=1 // pred_check_branch
      %36 = sbr.rel (0) target = $region9
    $region8: #{tpu_custom_call.1} parent=1 // pred_region
      %s37 = sadd.s32 0, 0
      %s38 = sld [smem:[#allocation4 + %s37]]
      %s39 = smul.u32 48, %s38
      %41 = vsyncadd [#allocation10], 0
      %s42 = smul.addr %s39, 4
      %s43 = scalar_lea.hbm %s3, %s42
      %s44 = sshll.u32 %s43, 4
      %s45 = int_to_ptr.hbm [resolvable:$true] %s44
      %s46 = sshll.u32 [#allocation9], 4
      %s47 = int_to_ptr.vmem [resolvable:$true] %s46
      %52 = dma.hbm_to_vmem [thread:$0]  %s45, 3072, %s47, [#allocation10], 64, 64, 4
    $region9: #{tpu_custom_call.1} parent=1 // pred_fallthru
      _
    // Predicated region
    $region10: #{tpu_custom_call.1} parent=1 // pred_check
      _
    $region11: #{tpu_custom_call.1} parent=1 // pred_check_branch
      %54 = sbr.rel (0) target = $region13
    $region12: #{tpu_custom_call.1} parent=1 // pred_region
      %56 = vsyncadd [#allocation10], 0
      %s57 = sshll.u32 %s4, 4
      %s58 = int_to_ptr.hbm [resolvable:$true] %s57
      %s59 = sshll.u32 [#allocation11], 4
      %s60 = int_to_ptr.vmem [resolvable:$true] %s59
      %65 = dma.hbm_to_vmem [thread:$0]  %s58, 1024, %s60, [#allocation10], 64, 64, 4
    $region13: #{tpu_custom_call.1} parent=1 // pred_fallthru
      _
    // Predicated region
    $region14: #{tpu_custom_call.1} parent=1 // pred_check
      _
    $region15: #{tpu_custom_call.1} parent=1 // pred_check_branch
      %67 = sbr.rel (0) target = $region17
    $region16: #{tpu_custom_call.1} parent=1 // pred_region
      _
    $region17: #{tpu_custom_call.1} parent=1 // pred_fallthru
      _
    // Predicated region
    $region18: #{tpu_custom_call.1} parent=1 // pred_check
      _
    $region19: #{tpu_custom_call.1} parent=1 // pred_check_branch
      %69 = sbr.rel (0) target = $region21
    $region20: #{tpu_custom_call.1} parent=1 // pred_region
      _
    $region21: #{tpu_custom_call.1} parent=1 // pred_fallthru
      _
    // Predicated region
    $region22: #{tpu_custom_call.1} parent=1 // pred_check
      _
    $region23: #{tpu_custom_call.1} parent=1 // pred_check_branch
      %71 = sbr.rel (0) target = $region25
    $region24: #{tpu_custom_call.1} parent=1 // pred_region
      %73 = dma.done [#allocation7], 9216
    $region25: #{tpu_custom_call.1} parent=1 // pred_fallthru
      _
    // Predicated region
    $region26: #{tpu_custom_call.1} parent=1 // pred_check
      _
    $region27: #{tpu_custom_call.1} parent=1 // pred_check_branch
      %75 = sbr.rel (0) target = $region29
    $region28: #{tpu_custom_call.1} parent=1 // pred_region
      %77 = dma.done [#allocation10], 3072
    $region29: #{tpu_custom_call.1} parent=1 // pred_fallthru
      _
    // Predicated region
    $region30: #{tpu_custom_call.1} parent=1 // pred_check
      _
    $region31: #{tpu_custom_call.1} parent=1 // pred_check_branch
      %79 = sbr.rel (0) target = $region33
    $region32: #{tpu_custom_call.1} parent=1 // pred_region
      %81 = dma.done [#allocation10], 1024
    $region33: #{tpu_custom_call.1} parent=1 // pred_fallthru
      _
    %s82 = sadd.s32 0, 0
    %s83 = sld [smem:[#allocation4 + %s82]]
    %s84 = smul.u32 3, %s83
    %s85 = sadd.s32 0, 0
    %s86 = sld [smem:[#allocation4 + %s85]]
    %s87 = smul.u32 48, %s86
    %p88 = scmp.eq.s32.totalorder 0, 0
    // Predicated region
    $region34: #{tpu_custom_call.1} parent=1 // pred_check
      %p89 = pneg %p88
    $region35: #{tpu_custom_call.1} parent=1 // pred_check_branch
      %91 = sbr.rel (%p89) target = $region37
    $region36: #{tpu_custom_call.1} parent=1 // pred_region
      %92 = vst [vmem:[#allocation2] sm:$0xff] 0.0
      %93 = vst [vmem:[#allocation2 + $0x8] sm:$0xff] 0.0
      %94 = vst [vmem:[#allocation2 + $0x10] sm:$0xff] 0.0
      %95 = vst [vmem:[#allocation2 + $0x18] sm:$0xff] 0.0
      %96 = vst [vmem:[#allocation2 + $0x20] sm:$0xff] 0.0
      %97 = vst [vmem:[#allocation2 + $0x28] sm:$0xff] 0.0
      %98 = vst [vmem:[#allocation2 + $0x30] sm:$0xff] 0.0
      %99 = vst [vmem:[#allocation2 + $0x38] sm:$0xff] 0.0
      %100 = vst [vmem:[#allocation2 + $0x40] sm:$0xff] 0.0
      %101 = vst [vmem:[#allocation2 + $0x48] sm:$0xff] 0.0
      %102 = vst [vmem:[#allocation2 + $0x50] sm:$0xff] 0.0
      %103 = vst [vmem:[#allocation2 + $0x58] sm:$0xff] 0.0
      %104 = vst [vmem:[#allocation2 + $0x60] sm:$0xff] 0.0
      %105 = vst [vmem:[#allocation2 + $0x68] sm:$0xff] 0.0
      %106 = vst [vmem:[#allocation2 + $0x70] sm:$0xff] 0.0
      %107 = vst [vmem:[#allocation2 + $0x78] sm:$0xff] 0.0
      %108 = vst [vmem:[#allocation2 + $0x80] sm:$0xff] 0.0
      %109 = vst [vmem:[#allocation2 + $0x88] sm:$0xff] 0.0
      %110 = vst [vmem:[#allocation2 + $0x90] sm:$0xff] 0.0
      %111 = vst [vmem:[#allocation2 + $0x98] sm:$0xff] 0.0
      %112 = vst [vmem:[#allocation2 + $0xa0] sm:$0xff] 0.0
      %113 = vst [vmem:[#allocation2 + $0xa8] sm:$0xff] 0.0
      %114 = vst [vmem:[#allocation2 + $0xb0] sm:$0xff] 0.0
      %115 = vst [vmem:[#allocation2 + $0xb8] sm:$0xff] 0.0
      %116 = vst [vmem:[#allocation2 + $0xc0] sm:$0xff] 0.0
      %117 = vst [vmem:[#allocation2 + $0xc8] sm:$0xff] 0.0
      %118 = vst [vmem:[#allocation2 + $0xd0] sm:$0xff] 0.0
      %119 = vst [vmem:[#allocation2 + $0xd8] sm:$0xff] 0.0
      %120 = vst [vmem:[#allocation2 + $0xe0] sm:$0xff] 0.0
      %121 = vst [vmem:[#allocation2 + $0xe8] sm:$0xff] 0.0
      %122 = vst [vmem:[#allocation2 + $0xf0] sm:$0xff] 0.0
      %123 = vst [vmem:[#allocation2 + $0xf8] sm:$0xff] 0.0
      %124 = vst [vmem:[#allocation2 + $0x100] sm:$0xff] 0.0
      %125 = vst [vmem:[#allocation2 + $0x108] sm:$0xff] 0.0
      %126 = vst [vmem:[#allocation2 + $0x110] sm:$0xff] 0.0
      %127 = vst [vmem:[#allocation2 + $0x118] sm:$0xff] 0.0
      %128 = vst [vmem:[#allocation2 + $0x120] sm:$0xff] 0.0
      %129 = vst [vmem:[#allocation2 + $0x128] sm:$0xff] 0.0
      %130 = vst [vmem:[#allocation2 + $0x130] sm:$0xff] 0.0
      %131 = vst [vmem:[#allocation2 + $0x138] sm:$0xff] 0.0
      %132 = vst [vmem:[#allocation2 + $0x140] sm:$0xff] 0.0
      %133 = vst [vmem:[#allocation2 + $0x148] sm:$0xff] 0.0
      %134 = vst [vmem:[#allocation2 + $0x150] sm:$0xff] 0.0
      %135 = vst [vmem:[#allocation2 + $0x158] sm:$0xff] 0.0
      %136 = vst [vmem:[#allocation2 + $0x160] sm:$0xff] 0.0
      %137 = vst [vmem:[#allocation2 + $0x168] sm:$0xff] 0.0
      %138 = vst [vmem:[#allocation2 + $0x170] sm:$0xff] 0.0
      %139 = vst [vmem:[#allocation2 + $0x178] sm:$0xff] 0.0
    $region37: #{tpu_custom_call.1} parent=1 // pred_fallthru
      _
    %s140 = sld [smem:[#allocation5]]
    %p141 = scmp.lt.s32.totalorder 0, %s140
    // Predicated region
    $region38: #{tpu_custom_call.1} parent=1 // pred_check
      %p142 = pneg %p141
    $region39: #{tpu_custom_call.1} parent=1 // pred_check_branch
      %144 = sbr.rel (%p142) target = $region41
    $region40: #{tpu_custom_call.1} parent=1 // pred_region
      %v145 = vld [vmem:[#allocation2] sm:$0xff]
      %v146 = vld [vmem:[#allocation2 + $0x8] sm:$0xff]
      %v147 = vld [vmem:[#allocation2 + $0x10] sm:$0xff]
      %v148 = vld [vmem:[#allocation2 + $0x18] sm:$0xff]
      %v149 = vld [vmem:[#allocation2 + $0x20] sm:$0xff]
      %v150 = vld [vmem:[#allocation2 + $0x28] sm:$0xff]
      %v151 = vld [vmem:[#allocation2 + $0x30] sm:$0xff]
      %v152 = vld [vmem:[#allocation2 + $0x38] sm:$0xff]
      %v153 = vld [vmem:[#allocation2 + $0x40] sm:$0xff]
      %v154 = vld [vmem:[#allocation2 + $0x48] sm:$0xff]
      %v155 = vld [vmem:[#allocation2 + $0x50] sm:$0xff]
      %v156 = vld [vmem:[#allocation2 + $0x58] sm:$0xff]
      %v157 = vld [vmem:[#allocation2 + $0x60] sm:$0xff]
      %v158 = vld [vmem:[#allocation2 + $0x68] sm:$0xff]
      %v159 = vld [vmem:[#allocation2 + $0x70] sm:$0xff]
      %v160 = vld [vmem:[#allocation2 + $0x78] sm:$0xff]
      %v161 = vld [vmem:[#allocation2 + $0x80] sm:$0xff]
      %v162 = vld [vmem:[#allocation2 + $0x88] sm:$0xff]
      %v163 = vld [vmem:[#allocation2 + $0x90] sm:$0xff]
      %v164 = vld [vmem:[#allocation2 + $0x98] sm:$0xff]
      %v165 = vld [vmem:[#allocation2 + $0xa0] sm:$0xff]
      %v166 = vld [vmem:[#allocation2 + $0xa8] sm:$0xff]
      %v167 = vld [vmem:[#allocation2 + $0xb0] sm:$0xff]
      %v168 = vld [vmem:[#allocation2 + $0xb8] sm:$0xff]
      %v169 = vld [vmem:[#allocation2 + $0xc0] sm:$0xff]
      %v170 = vld [vmem:[#allocation2 + $0xc8] sm:$0xff]
      %v171 = vld [vmem:[#allocation2 + $0xd0] sm:$0xff]
      %v172 = vld [vmem:[#allocation2 + $0xd8] sm:$0xff]
      %v173 = vld [vmem:[#allocation2 + $0xe0] sm:$0xff]
      %v174 = vld [vmem:[#allocation2 + $0xe8] sm:$0xff]
      %v175 = vld [vmem:[#allocation2 + $0xf0] sm:$0xff]
      %v176 = vld [vmem:[#allocation2 + $0xf8] sm:$0xff]
      %v177 = vld [vmem:[#allocation2 + $0x100] sm:$0xff]
      %v178 = vld [vmem:[#allocation2 + $0x108] sm:$0xff]
      %v179 = vld [vmem:[#allocation2 + $0x110] sm:$0xff]
      %v180 = vld [vmem:[#allocation2 + $0x118] sm:$0xff]
      %v181 = vld [vmem:[#allocation2 + $0x120] sm:$0xff]
      %v182 = vld [vmem:[#allocation2 + $0x128] sm:$0xff]
      %v183 = vld [vmem:[#allocation2 + $0x130] sm:$0xff]
      %v184 = vld [vmem:[#allocation2 + $0x138] sm:$0xff]
      %v185 = vld [vmem:[#allocation2 + $0x140] sm:$0xff]
      %v186 = vld [vmem:[#allocation2 + $0x148] sm:$0xff]
      %v187 = vld [vmem:[#allocation2 + $0x150] sm:$0xff]
      %v188 = vld [vmem:[#allocation2 + $0x158] sm:$0xff]
      %v189 = vld [vmem:[#allocation2 + $0x160] sm:$0xff]
      %v190 = vld [vmem:[#allocation2 + $0x168] sm:$0xff]
      %v191 = vld [vmem:[#allocation2 + $0x170] sm:$0xff]
      %v192 = vld [vmem:[#allocation2 + $0x178] sm:$0xff]
      %v193 = vld [vmem:[#allocation6] sm:$0xff]
      %v194 = vld [vmem:[#allocation6 + $0x8] sm:$0xf]
      %v195 = vld [vmem:[#allocation6 + $0xc] sm:$0xff]
      %v196 = vld [vmem:[#allocation6 + $0x14] sm:$0xf]
      %v197 = vld [vmem:[#allocation6 + $0x18] sm:$0xff]
      %v198 = vld [vmem:[#allocation6 + $0x20] sm:$0xf]
      %v199 = vld [vmem:[#allocation6 + $0x24] sm:$0xff]
      %v200 = vld [vmem:[#allocation6 + $0x2c] sm:$0xf]
      %v201 = vld [vmem:[#allocation6 + $0x30] sm:$0xff]
      %v202 = vld [vmem:[#allocation6 + $0x38] sm:$0xf]
      %v203 = vld [vmem:[#allocation6 + $0x3c] sm:$0xff]
      %v204 = vld [vmem:[#allocation6 + $0x44] sm:$0xf]
      %v205 = vld [vmem:[#allocation6 + $0x48] sm:$0xff]
      %v206 = vld [vmem:[#allocation6 + $0x50] sm:$0xf]
      %v207 = vld [vmem:[#allocation6 + $0x54] sm:$0xff]
      %v208 = vld [vmem:[#allocation6 + $0x5c] sm:$0xf]
      %v209 = vld [vmem:[#allocation6 + $0x60] sm:$0xff]
      %v210 = vld [vmem:[#allocation6 + $0x68] sm:$0xf]
      %v211 = vld [vmem:[#allocation6 + $0x6c] sm:$0xff]
      %v212 = vld [vmem:[#allocation6 + $0x74] sm:$0xf]
      %v213 = vld [vmem:[#allocation6 + $0x78] sm:$0xff]
      %v214 = vld [vmem:[#allocation6 + $0x80] sm:$0xf]
      %v215 = vld [vmem:[#allocation6 + $0x84] sm:$0xff]
      %v216 = vld [vmem:[#allocation6 + $0x8c] sm:$0xf]
      %v217 = vld [vmem:[#allocation6 + $0x90] sm:$0xff]
      %v218 = vld [vmem:[#allocation6 + $0x98] sm:$0xf]
      %v219 = vld [vmem:[#allocation6 + $0x9c] sm:$0xff]
      %v220 = vld [vmem:[#allocation6 + $0xa4] sm:$0xf]
      %v221 = vld [vmem:[#allocation6 + $0xa8] sm:$0xff]
      %v222 = vld [vmem:[#allocation6 + $0xb0] sm:$0xf]
      %v223 = vld [vmem:[#allocation6 + $0xb4] sm:$0xff]
      %v224 = vld [vmem:[#allocation6 + $0xbc] sm:$0xf]
      %v225 = vld [vmem:[#allocation6 + $0xc0] sm:$0xff]
      %v226 = vld [vmem:[#allocation6 + $0xc8] sm:$0xf]
      %v227 = vld [vmem:[#allocation6 + $0xcc] sm:$0xff]
      %v228 = vld [vmem:[#allocation6 + $0xd4] sm:$0xf]
      %v229 = vld [vmem:[#allocation6 + $0xd8] sm:$0xff]
      %v230 = vld [vmem:[#allocation6 + $0xe0] sm:$0xf]
      %v231 = vld [vmem:[#allocation6 + $0xe4] sm:$0xff]
      %v232 = vld [vmem:[#allocation6 + $0xec] sm:$0xf]
      %v233 = vld [vmem:[#allocation6 + $0xf0] sm:$0xff]
      %v234 = vld [vmem:[#allocation6 + $0xf8] sm:$0xf]
      %v235 = vld [vmem:[#allocation6 + $0xfc] sm:$0xff]
      %v236 = vld [vmem:[#allocation6 + $0x104] sm:$0xf]
      %v237 = vld [vmem:[#allocation6 + $0x108] sm:$0xff]
      %v238 = vld [vmem:[#allocation6 + $0x110] sm:$0xf]
      %v239 = vld [vmem:[#allocation6 + $0x114] sm:$0xff]
      %v240 = vld [vmem:[#allocation6 + $0x11c] sm:$0xf]
      %v241 = vld [vmem:[#allocation6 + $0x120] sm:$0xff]
      %v242 = vld [vmem:[#allocation6 + $0x128] sm:$0xf]
      %v243 = vld [vmem:[#allocation6 + $0x12c] sm:$0xff]
      %v244 = vld [vmem:[#allocation6 + $0x134] sm:$0xf]
      %v245 = vld [vmem:[#allocation6 + $0x138] sm:$0xff]
      %v246 = vld [vmem:[#allocation6 + $0x140] sm:$0xf]
      %v247 = vld [vmem:[#allocation6 + $0x144] sm:$0xff]
      %v248 = vld [vmem:[#allocation6 + $0x14c] sm:$0xf]
      %v249 = vld [vmem:[#allocation6 + $0x150] sm:$0xff]
      %v250 = vld [vmem:[#allocation6 + $0x158] sm:$0xf]
      %v251 = vld [vmem:[#allocation6 + $0x15c] sm:$0xff]
      %v252 = vld [vmem:[#allocation6 + $0x164] sm:$0xf]
      %v253 = vld [vmem:[#allocation6 + $0x168] sm:$0xff]
      %v254 = vld [vmem:[#allocation6 + $0x170] sm:$0xf]
      %v255 = vld [vmem:[#allocation6 + $0x174] sm:$0xff]
      %v256 = vld [vmem:[#allocation6 + $0x17c] sm:$0xf]
      %v257 = vld [vmem:[#allocation6 + $0x180] sm:$0xff]
      %v258 = vld [vmem:[#allocation6 + $0x188] sm:$0xf]
      %v259 = vld [vmem:[#allocation6 + $0x18c] sm:$0xff]
      %v260 = vld [vmem:[#allocation6 + $0x194] sm:$0xf]
      %v261 = vld [vmem:[#allocation6 + $0x198] sm:$0xff]
      %v262 = vld [vmem:[#allocation6 + $0x1a0] sm:$0xf]
      %v263 = vld [vmem:[#allocation6 + $0x1a4] sm:$0xff]
      %v264 = vld [vmem:[#allocation6 + $0x1ac] sm:$0xf]
      %v265 = vld [vmem:[#allocation6 + $0x1b0] sm:$0xff]
      %v266 = vld [vmem:[#allocation6 + $0x1b8] sm:$0xf]
      %v267 = vld [vmem:[#allocation6 + $0x1bc] sm:$0xff]
      %v268 = vld [vmem:[#allocation6 + $0x1c4] sm:$0xf]
      %v269 = vld [vmem:[#allocation6 + $0x1c8] sm:$0xff]
      %v270 = vld [vmem:[#allocation6 + $0x1d0] sm:$0xf]
      %v271 = vld [vmem:[#allocation6 + $0x1d4] sm:$0xff]
      %v272 = vld [vmem:[#allocation6 + $0x1dc] sm:$0xf]
      %v273 = vld [vmem:[#allocation6 + $0x1e0] sm:$0xff]
      %v274 = vld [vmem:[#allocation6 + $0x1e8] sm:$0xf]
      %v275 = vld [vmem:[#allocation6 + $0x1ec] sm:$0xff]
      %v276 = vld [vmem:[#allocation6 + $0x1f4] sm:$0xf]
      %v277 = vld [vmem:[#allocation6 + $0x1f8] sm:$0xff]
      %v278 = vld [vmem:[#allocation6 + $0x200] sm:$0xf]
      %v279 = vld [vmem:[#allocation6 + $0x204] sm:$0xff]
      %v280 = vld [vmem:[#allocation6 + $0x20c] sm:$0xf]
      %v281 = vld [vmem:[#allocation6 + $0x210] sm:$0xff]
      %v282 = vld [vmem:[#allocation6 + $0x218] sm:$0xf]
      %v283 = vld [vmem:[#allocation6 + $0x21c] sm:$0xff]
      %v284 = vld [vmem:[#allocation6 + $0x224] sm:$0xf]
      %v285 = vld [vmem:[#allocation6 + $0x228] sm:$0xff]
      %v286 = vld [vmem:[#allocation6 + $0x230] sm:$0xf]
      %v287 = vld [vmem:[#allocation6 + $0x234] sm:$0xff]
      %v288 = vld [vmem:[#allocation6 + $0x23c] sm:$0xf]
      %v289 = vld [vmem:[#allocation9] sm:$0xf]
      %v290 = vld [vmem:[#allocation9 + $0x4] sm:$0xf]
      %v291 = vld [vmem:[#allocation9 + $0x8] sm:$0xf]
      %v292 = vld [vmem:[#allocation9 + $0xc] sm:$0xf]
      %v293 = vld [vmem:[#allocation9 + $0x10] sm:$0xf]
      %v294 = vld [vmem:[#allocation9 + $0x14] sm:$0xf]
      %v295 = vld [vmem:[#allocation9 + $0x18] sm:$0xf]
      %v296 = vld [vmem:[#allocation9 + $0x1c] sm:$0xf]
      %v297 = vld [vmem:[#allocation9 + $0x20] sm:$0xf]
      %v298 = vld [vmem:[#allocation9 + $0x24] sm:$0xf]
      %v299 = vld [vmem:[#allocation9 + $0x28] sm:$0xf]
      %v300 = vld [vmem:[#allocation9 + $0x2c] sm:$0xf]
      %v301 = vld [vmem:[#allocation9 + $0x30] sm:$0xf]
      %v302 = vld [vmem:[#allocation9 + $0x34] sm:$0xf]
      %v303 = vld [vmem:[#allocation9 + $0x38] sm:$0xf]
      %v304 = vld [vmem:[#allocation9 + $0x3c] sm:$0xf]
      %v305 = vld [vmem:[#allocation9 + $0x40] sm:$0xf]
      %v306 = vld [vmem:[#allocation9 + $0x44] sm:$0xf]
      %v307 = vld [vmem:[#allocation9 + $0x48] sm:$0xf]
      %v308 = vld [vmem:[#allocation9 + $0x4c] sm:$0xf]
      %v309 = vld [vmem:[#allocation9 + $0x50] sm:$0xf]
      %v310 = vld [vmem:[#allocation9 + $0x54] sm:$0xf]
      %v311 = vld [vmem:[#allocation9 + $0x58] sm:$0xf]
      %v312 = vld [vmem:[#allocation9 + $0x5c] sm:$0xf]
      %v313 = vld [vmem:[#allocation9 + $0x60] sm:$0xf]
      %v314 = vld [vmem:[#allocation9 + $0x64] sm:$0xf]
      %v315 = vld [vmem:[#allocation9 + $0x68] sm:$0xf]
      %v316 = vld [vmem:[#allocation9 + $0x6c] sm:$0xf]
      %v317 = vld [vmem:[#allocation9 + $0x70] sm:$0xf]
      %v318 = vld [vmem:[#allocation9 + $0x74] sm:$0xf]
      %v319 = vld [vmem:[#allocation9 + $0x78] sm:$0xf]
      %v320 = vld [vmem:[#allocation9 + $0x7c] sm:$0xf]
      %v321 = vld [vmem:[#allocation9 + $0x80] sm:$0xf]
      %v322 = vld [vmem:[#allocation9 + $0x84] sm:$0xf]
      %v323 = vld [vmem:[#allocation9 + $0x88] sm:$0xf]
      %v324 = vld [vmem:[#allocation9 + $0x8c] sm:$0xf]
      %v325 = vld [vmem:[#allocation9 + $0x90] sm:$0xf]
      %v326 = vld [vmem:[#allocation9 + $0x94] sm:$0xf]
      %v327 = vld [vmem:[#allocation9 + $0x98] sm:$0xf]
      %v328 = vld [vmem:[#allocation9 + $0x9c] sm:$0xf]
      %v329 = vld [vmem:[#allocation9 + $0xa0] sm:$0xf]
      %v330 = vld [vmem:[#allocation9 + $0xa4] sm:$0xf]
      %v331 = vld [vmem:[#allocation9 + $0xa8] sm:$0xf]
      %v332 = vld [vmem:[#allocation9 + $0xac] sm:$0xf]
      %v333 = vld [vmem:[#allocation9 + $0xb0] sm:$0xf]
      %v334 = vld [vmem:[#allocation9 + $0xb4] sm:$0xf]
      %v335 = vld [vmem:[#allocation9 + $0xb8] sm:$0xf]
      %v336 = vld [vmem:[#allocation9 + $0xbc] sm:$0xf]
      %v433 = vunpack.c.l.b16 %v193
      %v434 = vunpack.c.h.b16 %v193
      %v435 = vunpack.c.l.b16 %v194
      %v436 = vunpack.c.l.b16 %v195
      %v437 = vunpack.c.h.b16 %v195
      %v438 = vunpack.c.l.b16 %v196
      %v439 = vunpack.c.l.b16 %v197
      %v440 = vunpack.c.h.b16 %v197
      %v441 = vunpack.c.l.b16 %v198
      %v442 = vunpack.c.l.b16 %v199
      %v443 = vunpack.c.h.b16 %v199
      %v444 = vunpack.c.l.b16 %v200
      %v445 = vunpack.c.l.b16 %v201
      %v446 = vunpack.c.h.b16 %v201
      %v447 = vunpack.c.l.b16 %v202
      %v448 = vunpack.c.l.b16 %v203
      %v449 = vunpack.c.h.b16 %v203
      %v450 = vunpack.c.l.b16 %v204
      %v451 = vunpack.c.l.b16 %v205
      %v452 = vunpack.c.h.b16 %v205
      %v453 = vunpack.c.l.b16 %v206
      %v454 = vunpack.c.l.b16 %v207
      %v455 = vunpack.c.h.b16 %v207
      %v456 = vunpack.c.l.b16 %v208
      %v457 = vunpack.c.l.b16 %v209
      %v458 = vunpack.c.h.b16 %v209
      %v459 = vunpack.c.l.b16 %v210
      %v460 = vunpack.c.l.b16 %v211
      %v461 = vunpack.c.h.b16 %v211
      %v462 = vunpack.c.l.b16 %v212
      %v463 = vunpack.c.l.b16 %v213
      %v464 = vunpack.c.h.b16 %v213
      %v465 = vunpack.c.l.b16 %v214
      %v466 = vunpack.c.l.b16 %v215
      %v467 = vunpack.c.h.b16 %v215
      %v468 = vunpack.c.l.b16 %v216
      %v469 = vunpack.c.l.b16 %v217
      %v470 = vunpack.c.h.b16 %v217
      %v471 = vunpack.c.l.b16 %v218
      %v472 = vunpack.c.l.b16 %v219
      %v473 = vunpack.c.h.b16 %v219
      %v474 = vunpack.c.l.b16 %v220
      %v475 = vunpack.c.l.b16 %v221
      %v476 = vunpack.c.h.b16 %v221
      %v477 = vunpack.c.l.b16 %v222
      %v478 = vunpack.c.l.b16 %v223
      %v479 = vunpack.c.h.b16 %v223
      %v480 = vunpack.c.l.b16 %v224
      %v481 = vunpack.c.l.b16 %v225
      %v482 = vunpack.c.h.b16 %v225
      %v483 = vunpack.c.l.b16 %v226
      %v484 = vunpack.c.l.b16 %v227
      %v485 = vunpack.c.h.b16 %v227
      %v486 = vunpack.c.l.b16 %v228
      %v487 = vunpack.c.l.b16 %v229
      %v488 = vunpack.c.h.b16 %v229
      %v489 = vunpack.c.l.b16 %v230
      %v490 = vunpack.c.l.b16 %v231
      %v491 = vunpack.c.h.b16 %v231
      %v492 = vunpack.c.l.b16 %v232
      %v493 = vunpack.c.l.b16 %v233
      %v494 = vunpack.c.h.b16 %v233
      %v495 = vunpack.c.l.b16 %v234
      %v496 = vunpack.c.l.b16 %v235
      %v497 = vunpack.c.h.b16 %v235
      %v498 = vunpack.c.l.b16 %v236
      %v499 = vunpack.c.l.b16 %v237
      %v500 = vunpack.c.h.b16 %v237
      %v501 = vunpack.c.l.b16 %v238
      %v502 = vunpack.c.l.b16 %v239
      %v503 = vunpack.c.h.b16 %v239
      %v504 = vunpack.c.l.b16 %v240
      %v505 = vunpack.c.l.b16 %v241
      %v506 = vunpack.c.h.b16 %v241
      %v507 = vunpack.c.l.b16 %v242
      %v508 = vunpack.c.l.b16 %v243
      %v509 = vunpack.c.h.b16 %v243
      %v510 = vunpack.c.l.b16 %v244
      %v511 = vunpack.c.l.b16 %v245
      %v512 = vunpack.c.h.b16 %v245
      %v513 = vunpack.c.l.b16 %v246
      %v514 = vunpack.c.l.b16 %v247
      %v515 = vunpack.c.h.b16 %v247
      %v516 = vunpack.c.l.b16 %v248
      %v517 = vunpack.c.l.b16 %v249
      %v518 = vunpack.c.h.b16 %v249
      %v519 = vunpack.c.l.b16 %v250
      %v520 = vunpack.c.l.b16 %v251
      %v521 = vunpack.c.h.b16 %v251
      %v522 = vunpack.c.l.b16 %v252
      %v523 = vunpack.c.l.b16 %v253
      %v524 = vunpack.c.h.b16 %v253
      %v525 = vunpack.c.l.b16 %v254
      %v526 = vunpack.c.l.b16 %v255
      %v527 = vunpack.c.h.b16 %v255
      %v528 = vunpack.c.l.b16 %v256
      %v529 = vunpack.c.l.b16 %v257
      %v530 = vunpack.c.h.b16 %v257
      %v531 = vunpack.c.l.b16 %v258
      %v532 = vunpack.c.l.b16 %v259
      %v533 = vunpack.c.h.b16 %v259
      %v534 = vunpack.c.l.b16 %v260
      %v535 = vunpack.c.l.b16 %v261
      %v536 = vunpack.c.h.b16 %v261
      %v537 = vunpack.c.l.b16 %v262
      %v538 = vunpack.c.l.b16 %v263
      %v539 = vunpack.c.h.b16 %v263
      %v540 = vunpack.c.l.b16 %v264
      %v541 = vunpack.c.l.b16 %v265
      %v542 = vunpack.c.h.b16 %v265
      %v543 = vunpack.c.l.b16 %v266
      %v544 = vunpack.c.l.b16 %v267
      %v545 = vunpack.c.h.b16 %v267
      %v546 = vunpack.c.l.b16 %v268
      %v547 = vunpack.c.l.b16 %v269
      %v548 = vunpack.c.h.b16 %v269
      %v549 = vunpack.c.l.b16 %v270
      %v550 = vunpack.c.l.b16 %v271
      %v551 = vunpack.c.h.b16 %v271
      %v552 = vunpack.c.l.b16 %v272
      %v553 = vunpack.c.l.b16 %v273
      %v554 = vunpack.c.h.b16 %v273
      %v555 = vunpack.c.l.b16 %v274
      %v556 = vunpack.c.l.b16 %v275
      %v557 = vunpack.c.h.b16 %v275
      %v558 = vunpack.c.l.b16 %v276
      %v559 = vunpack.c.l.b16 %v277
      %v560 = vunpack.c.h.b16 %v277
      %v561 = vunpack.c.l.b16 %v278
      %v562 = vunpack.c.l.b16 %v279
      %v563 = vunpack.c.h.b16 %v279
      %v564 = vunpack.c.l.b16 %v280
      %v565 = vunpack.c.l.b16 %v281
      %v566 = vunpack.c.h.b16 %v281
      %v567 = vunpack.c.l.b16 %v282
      %v568 = vunpack.c.l.b16 %v283
      %v569 = vunpack.c.h.b16 %v283
      %v570 = vunpack.c.l.b16 %v284
      %v571 = vunpack.c.l.b16 %v285
      %v572 = vunpack.c.h.b16 %v285
      %v573 = vunpack.c.l.b16 %v286
      %v574 = vunpack.c.l.b16 %v287
      %v575 = vunpack.c.h.b16 %v287
      %v576 = vunpack.c.l.b16 %v288
      %v577 = vpack.c.b16 %v436, %v433
      %v578 = vpack.c.b16 %v437, %v434
      %v579 = vpack.c.b16 %v438, %v435
      %v580 = vpack.c.b16 %v442, %v439
      %v581 = vpack.c.b16 %v443, %v440
      %v582 = vpack.c.b16 %v444, %v441
      %v583 = vpack.c.b16 %v448, %v445
      %v584 = vpack.c.b16 %v449, %v446
      %v585 = vpack.c.b16 %v450, %v447
      %v586 = vpack.c.b16 %v454, %v451
      %v587 = vpack.c.b16 %v455, %v452
      %v588 = vpack.c.b16 %v456, %v453
      %v589 = vpack.c.b16 %v460, %v457
      %v590 = vpack.c.b16 %v461, %v458
      %v591 = vpack.c.b16 %v462, %v459
      %v592 = vpack.c.b16 %v466, %v463
      %v593 = vpack.c.b16 %v467, %v464
      %v594 = vpack.c.b16 %v468, %v465
      %v595 = vpack.c.b16 %v472, %v469
      %v596 = vpack.c.b16 %v473, %v470
      %v597 = vpack.c.b16 %v474, %v471
      %v598 = vpack.c.b16 %v478, %v475
      %v599 = vpack.c.b16 %v479, %v476
      %v600 = vpack.c.b16 %v480, %v477
      %v601 = vpack.c.b16 %v484, %v481
      %v602 = vpack.c.b16 %v485, %v482
      %v603 = vpack.c.b16 %v486, %v483
      %v604 = vpack.c.b16 %v490, %v487
      %v605 = vpack.c.b16 %v491, %v488
      %v606 = vpack.c.b16 %v492, %v489
      %v607 = vpack.c.b16 %v496, %v493
      %v608 = vpack.c.b16 %v497, %v494
      %v609 = vpack.c.b16 %v498, %v495
      %v610 = vpack.c.b16 %v502, %v499
      %v611 = vpack.c.b16 %v503, %v500
      %v612 = vpack.c.b16 %v504, %v501
      %v613 = vpack.c.b16 %v508, %v505
      %v614 = vpack.c.b16 %v509, %v506
      %v615 = vpack.c.b16 %v510, %v507
      %v616 = vpack.c.b16 %v514, %v511
      %v617 = vpack.c.b16 %v515, %v512
      %v618 = vpack.c.b16 %v516, %v513
      %v619 = vpack.c.b16 %v520, %v517
      %v620 = vpack.c.b16 %v521, %v518
      %v621 = vpack.c.b16 %v522, %v519
      %v622 = vpack.c.b16 %v526, %v523
      %v623 = vpack.c.b16 %v527, %v524
      %v624 = vpack.c.b16 %v528, %v525
      %v625 = vpack.c.b16 %v532, %v529
      %v626 = vpack.c.b16 %v533, %v530
      %v627 = vpack.c.b16 %v534, %v531
      %v628 = vpack.c.b16 %v538, %v535
      %v629 = vpack.c.b16 %v539, %v536
      %v630 = vpack.c.b16 %v540, %v537
      %v631 = vpack.c.b16 %v544, %v541
      %v632 = vpack.c.b16 %v545, %v542
      %v633 = vpack.c.b16 %v546, %v543
      %v634 = vpack.c.b16 %v550, %v547
      %v635 = vpack.c.b16 %v551, %v548
      %v636 = vpack.c.b16 %v552, %v549
      %v637 = vpack.c.b16 %v556, %v553
      %v638 = vpack.c.b16 %v557, %v554
      %v639 = vpack.c.b16 %v558, %v555
      %v640 = vpack.c.b16 %v562, %v559
      %v641 = vpack.c.b16 %v563, %v560
      %v642 = vpack.c.b16 %v564, %v561
      %v643 = vpack.c.b16 %v568, %v565
      %v644 = vpack.c.b16 %v569, %v566
      %v645 = vpack.c.b16 %v570, %v567
      %v646 = vpack.c.b16 %v574, %v571
      %v647 = vpack.c.b16 %v575, %v572
      %v648 = vpack.c.b16 %v576, %v573
      %v769 = vunpack.c.l.b16 %v289
      %v770 = vunpack.c.l.b16 %v290
      %v771 = vunpack.c.l.b16 %v291
      %v772 = vunpack.c.l.b16 %v292
      %v773 = vunpack.c.l.b16 %v293
      %v774 = vunpack.c.l.b16 %v294
      %v775 = vunpack.c.l.b16 %v295
      %v776 = vunpack.c.l.b16 %v296
      %v777 = vunpack.c.l.b16 %v297
      %v778 = vunpack.c.l.b16 %v298
      %v779 = vunpack.c.l.b16 %v299
      %v780 = vunpack.c.l.b16 %v300
      %v781 = vunpack.c.l.b16 %v301
      %v782 = vunpack.c.l.b16 %v302
      %v783 = vunpack.c.l.b16 %v303
      %v784 = vunpack.c.l.b16 %v304
      %v785 = vunpack.c.l.b16 %v305
      %v786 = vunpack.c.l.b16 %v306
      %v787 = vunpack.c.l.b16 %v307
      %v788 = vunpack.c.l.b16 %v308
      %v789 = vunpack.c.l.b16 %v309
      %v790 = vunpack.c.l.b16 %v310
      %v791 = vunpack.c.l.b16 %v311
      %v792 = vunpack.c.l.b16 %v312
      %v793 = vunpack.c.l.b16 %v313
      %v794 = vunpack.c.l.b16 %v314
      %v795 = vunpack.c.l.b16 %v315
      %v796 = vunpack.c.l.b16 %v316
      %v797 = vunpack.c.l.b16 %v317
      %v798 = vunpack.c.l.b16 %v318
      %v799 = vunpack.c.l.b16 %v319
      %v800 = vunpack.c.l.b16 %v320
      %v801 = vunpack.c.l.b16 %v321
      %v802 = vunpack.c.l.b16 %v322
      %v803 = vunpack.c.l.b16 %v323
      %v804 = vunpack.c.l.b16 %v324
      %v805 = vunpack.c.l.b16 %v325
      %v806 = vunpack.c.l.b16 %v326
      %v807 = vunpack.c.l.b16 %v327
      %v808 = vunpack.c.l.b16 %v328
      %v809 = vunpack.c.l.b16 %v329
      %v810 = vunpack.c.l.b16 %v330
      %v811 = vunpack.c.l.b16 %v331
      %v812 = vunpack.c.l.b16 %v332
      %v813 = vunpack.c.l.b16 %v333
      %v814 = vunpack.c.l.b16 %v334
      %v815 = vunpack.c.l.b16 %v335
      %v816 = vunpack.c.l.b16 %v336
      %v817 = vpack.c.b16 %v770, %v769
      %v818 = vpack.c.b16 %v772, %v771
      %v819 = vpack.c.b16 %v774, %v773
      %v820 = vpack.c.b16 %v776, %v775
      %v821 = vpack.c.b16 %v778, %v777
      %v822 = vpack.c.b16 %v780, %v779
      %v823 = vpack.c.b16 %v782, %v781
      %v824 = vpack.c.b16 %v784, %v783
      %v825 = vpack.c.b16 %v786, %v785
      %v826 = vpack.c.b16 %v788, %v787
      %v827 = vpack.c.b16 %v790, %v789
      %v828 = vpack.c.b16 %v792, %v791
      %v829 = vpack.c.b16 %v794, %v793
      %v830 = vpack.c.b16 %v796, %v795
      %v831 = vpack.c.b16 %v798, %v797
      %v832 = vpack.c.b16 %v800, %v799
      %v833 = vpack.c.b16 %v802, %v801
      %v834 = vpack.c.b16 %v804, %v803
      %v835 = vpack.c.b16 %v806, %v805
      %v836 = vpack.c.b16 %v808, %v807
      %v837 = vpack.c.b16 %v810, %v809
      %v838 = vpack.c.b16 %v812, %v811
      %v839 = vpack.c.b16 %v814, %v813
      %v840 = vpack.c.b16 %v816, %v815
      %865 = vmatpush.bf16.msra.mxu0 %v824
      %866 = vmatpush.bf16.msra.mxu0 %v823
      %867 = vmatpush.bf16.msra.mxu0 %v822
      %868 = vmatpush.bf16.msra.mxu0 %v821
      %869 = vmatpush.bf16.msra.mxu0 %v820
      %870 = vmatpush.bf16.msra.mxu0 %v819
      %871 = vmatpush.bf16.msra.mxu0 %v818
      %872 = vmatpush.bf16.msra.mxu0 %v817
      %873 = vmatmul.bf16.gmra.mxu0 %v577
      %v874 = vpop.f32.mrf.mxu0
      %v875 = vadd.f32 0.0, %v874
      %v876 = vpop.f32.mrf.mxu0
      %v877 = vadd.f32 0.0, %v876
      %878 = vmatmul.bf16.gmra.mxu0 %v580
      %v879 = vpop.f32.mrf.mxu0
      %v880 = vadd.f32 0.0, %v879
      %v881 = vpop.f32.mrf.mxu0
      %v882 = vadd.f32 0.0, %v881
      %883 = vmatmul.bf16.gmra.mxu0 %v583
      %v884 = vpop.f32.mrf.mxu0
      %v885 = vadd.f32 0.0, %v884
      %v886 = vpop.f32.mrf.mxu0
      %v887 = vadd.f32 0.0, %v886
      %888 = vmatmul.bf16.gmra.mxu0 %v586
      %v889 = vpop.f32.mrf.mxu0
      %v890 = vadd.f32 0.0, %v889
      %v891 = vpop.f32.mrf.mxu0
      %v892 = vadd.f32 0.0, %v891
      %893 = vmatmul.bf16.gmra.mxu0 %v589
      %v894 = vpop.f32.mrf.mxu0
      %v895 = vadd.f32 0.0, %v894
      %v896 = vpop.f32.mrf.mxu0
      %v897 = vadd.f32 0.0, %v896
      %898 = vmatmul.bf16.gmra.mxu0 %v592
      %v899 = vpop.f32.mrf.mxu0
      %v900 = vadd.f32 0.0, %v899
      %v901 = vpop.f32.mrf.mxu0
      %v902 = vadd.f32 0.0, %v901
      %903 = vmatmul.bf16.gmra.mxu0 %v595
      %v904 = vpop.f32.mrf.mxu0
      %v905 = vadd.f32 0.0, %v904
      %v906 = vpop.f32.mrf.mxu0
      %v907 = vadd.f32 0.0, %v906
      %908 = vmatmul.bf16.gmra.mxu0 %v598
      %v909 = vpop.f32.mrf.mxu0
      %v910 = vadd.f32 0.0, %v909
      %v911 = vpop.f32.mrf.mxu0
      %v912 = vadd.f32 0.0, %v911
      %913 = vmatmul.bf16.gmra.mxu0 %v601
      %v914 = vpop.f32.mrf.mxu0
      %v915 = vadd.f32 0.0, %v914
      %v916 = vpop.f32.mrf.mxu0
      %v917 = vadd.f32 0.0, %v916
      %918 = vmatmul.bf16.gmra.mxu0 %v604
      %v919 = vpop.f32.mrf.mxu0
      %v920 = vadd.f32 0.0, %v919
      %v921 = vpop.f32.mrf.mxu0
      %v922 = vadd.f32 0.0, %v921
      %923 = vmatmul.bf16.gmra.mxu0 %v607
      %v924 = vpop.f32.mrf.mxu0
      %v925 = vadd.f32 0.0, %v924
      %v926 = vpop.f32.mrf.mxu0
      %v927 = vadd.f32 0.0, %v926
      %928 = vmatmul.bf16.gmra.mxu0 %v610
      %v929 = vpop.f32.mrf.mxu0
      %v930 = vadd.f32 0.0, %v929
      %v931 = vpop.f32.mrf.mxu0
      %v932 = vadd.f32 0.0, %v931
      %933 = vmatmul.bf16.gmra.mxu0 %v613
      %v934 = vpop.f32.mrf.mxu0
      %v935 = vadd.f32 0.0, %v934
      %v936 = vpop.f32.mrf.mxu0
      %v937 = vadd.f32 0.0, %v936
      %938 = vmatmul.bf16.gmra.mxu0 %v616
      %v939 = vpop.f32.mrf.mxu0
      %v940 = vadd.f32 0.0, %v939
      %v941 = vpop.f32.mrf.mxu0
      %v942 = vadd.f32 0.0, %v941
      %943 = vmatmul.bf16.gmra.mxu0 %v619
      %v944 = vpop.f32.mrf.mxu0
      %v945 = vadd.f32 0.0, %v944
      %v946 = vpop.f32.mrf.mxu0
      %v947 = vadd.f32 0.0, %v946
      %948 = vmatmul.bf16.gmra.mxu0 %v622
      %v949 = vpop.f32.mrf.mxu0
      %v950 = vadd.f32 0.0, %v949
      %v951 = vpop.f32.mrf.mxu0
      %v952 = vadd.f32 0.0, %v951
      %953 = vmatmul.bf16.gmra.mxu0 %v625
      %v954 = vpop.f32.mrf.mxu0
      %v955 = vadd.f32 0.0, %v954
      %v956 = vpop.f32.mrf.mxu0
      %v957 = vadd.f32 0.0, %v956
      %958 = vmatmul.bf16.gmra.mxu0 %v628
      %v959 = vpop.f32.mrf.mxu0
      %v960 = vadd.f32 0.0, %v959
      %v961 = vpop.f32.mrf.mxu0
      %v962 = vadd.f32 0.0, %v961
      %963 = vmatmul.bf16.gmra.mxu0 %v631
      %v964 = vpop.f32.mrf.mxu0
      %v965 = vadd.f32 0.0, %v964
      %v966 = vpop.f32.mrf.mxu0
      %v967 = vadd.f32 0.0, %v966
      %968 = vmatmul.bf16.gmra.mxu0 %v634
      %v969 = vpop.f32.mrf.mxu0
      %v970 = vadd.f32 0.0, %v969
      %v971 = vpop.f32.mrf.mxu0
      %v972 = vadd.f32 0.0, %v971
      %973 = vmatmul.bf16.gmra.mxu0 %v637
      %v974 = vpop.f32.mrf.mxu0
      %v975 = vadd.f32 0.0, %v974
      %v976 = vpop.f32.mrf.mxu0
      %v977 = vadd.f32 0.0, %v976
      %978 = vmatmul.bf16.gmra.mxu0 %v640
      %v979 = vpop.f32.mrf.mxu0
      %v980 = vadd.f32 0.0, %v979
      %v981 = vpop.f32.mrf.mxu0
      %v982 = vadd.f32 0.0, %v981
      %983 = vmatmul.bf16.gmra.mxu0 %v643
      %v984 = vpop.f32.mrf.mxu0
      %v985 = vadd.f32 0.0, %v984
      %v986 = vpop.f32.mrf.mxu0
      %v987 = vadd.f32 0.0, %v986
      %988 = vmatmul.bf16.gmra.mxu0 %v646
      %v989 = vpop.f32.mrf.mxu0
      %v990 = vadd.f32 0.0, %v989
      %v991 = vpop.f32.mrf.mxu0
      %v992 = vadd.f32 0.0, %v991
      %993 = vdwg.mxu0
      %994 = vmatpush.bf16.msra.mxu0 %v832
      %995 = vmatpush.bf16.msra.mxu0 %v831
      %996 = vmatpush.bf16.msra.mxu0 %v830
      %997 = vmatpush.bf16.msra.mxu0 %v829
      %998 = vmatpush.bf16.msra.mxu0 %v828
      %999 = vmatpush.bf16.msra.mxu0 %v827
      %1000 = vmatpush.bf16.msra.mxu0 %v826
      %1001 = vmatpush.bf16.msra.mxu0 %v825
      %1002 = vmatmul.bf16.gmra.mxu0 %v578
      %v1003 = vpop.f32.mrf.mxu0
      %v1004 = vadd.f32 %v875, %v1003
      %v1005 = vpop.f32.mrf.mxu0
      %v1006 = vadd.f32 %v877, %v1005
      %1007 = vmatmul.bf16.gmra.mxu0 %v581
      %v1008 = vpop.f32.mrf.mxu0
      %v1009 = vadd.f32 %v880, %v1008
      %v1010 = vpop.f32.mrf.mxu0
      %v1011 = vadd.f32 %v882, %v1010
      %1012 = vmatmul.bf16.gmra.mxu0 %v584
      %v1013 = vpop.f32.mrf.mxu0
      %v1014 = vadd.f32 %v885, %v1013
      %v1015 = vpop.f32.mrf.mxu0
      %v1016 = vadd.f32 %v887, %v1015
      %1017 = vmatmul.bf16.gmra.mxu0 %v587
      %v1018 = vpop.f32.mrf.mxu0
      %v1019 = vadd.f32 %v890, %v1018
      %v1020 = vpop.f32.mrf.mxu0
      %v1021 = vadd.f32 %v892, %v1020
      %1022 = vmatmul.bf16.gmra.mxu0 %v590
      %v1023 = vpop.f32.mrf.mxu0
      %v1024 = vadd.f32 %v895, %v1023
      %v1025 = vpop.f32.mrf.mxu0
      %v1026 = vadd.f32 %v897, %v1025
      %1027 = vmatmul.bf16.gmra.mxu0 %v593
      %v1028 = vpop.f32.mrf.mxu0
      %v1029 = vadd.f32 %v900, %v1028
      %v1030 = vpop.f32.mrf.mxu0
      %v1031 = vadd.f32 %v902, %v1030
      %1032 = vmatmul.bf16.gmra.mxu0 %v596
      %v1033 = vpop.f32.mrf.mxu0
      %v1034 = vadd.f32 %v905, %v1033
      %v1035 = vpop.f32.mrf.mxu0
      %v1036 = vadd.f32 %v907, %v1035
      %1037 = vmatmul.bf16.gmra.mxu0 %v599
      %v1038 = vpop.f32.mrf.mxu0
      %v1039 = vadd.f32 %v910, %v1038
      %v1040 = vpop.f32.mrf.mxu0
      %v1041 = vadd.f32 %v912, %v1040
      %1042 = vmatmul.bf16.gmra.mxu0 %v602
      %v1043 = vpop.f32.mrf.mxu0
      %v1044 = vadd.f32 %v915, %v1043
      %v1045 = vpop.f32.mrf.mxu0
      %v1046 = vadd.f32 %v917, %v1045
      %1047 = vmatmul.bf16.gmra.mxu0 %v605
      %v1048 = vpop.f32.mrf.mxu0
      %v1049 = vadd.f32 %v920, %v1048
      %v1050 = vpop.f32.mrf.mxu0
      %v1051 = vadd.f32 %v922, %v1050
      %1052 = vmatmul.bf16.gmra.mxu0 %v608
      %v1053 = vpop.f32.mrf.mxu0
      %v1054 = vadd.f32 %v925, %v1053
      %v1055 = vpop.f32.mrf.mxu0
      %v1056 = vadd.f32 %v927, %v1055
      %1057 = vmatmul.bf16.gmra.mxu0 %v611
      %v1058 = vpop.f32.mrf.mxu0
      %v1059 = vadd.f32 %v930, %v1058
      %v1060 = vpop.f32.mrf.mxu0
      %v1061 = vadd.f32 %v932, %v1060
      %1062 = vmatmul.bf16.gmra.mxu0 %v614
      %v1063 = vpop.f32.mrf.mxu0
      %v1064 = vadd.f32 %v935, %v1063
      %v1065 = vpop.f32.mrf.mxu0
      %v1066 = vadd.f32 %v937, %v1065
      %1067 = vmatmul.bf16.gmra.mxu0 %v617
      %v1068 = vpop.f32.mrf.mxu0
      %v1069 = vadd.f32 %v940, %v1068
      %v1070 = vpop.f32.mrf.mxu0
      %v1071 = vadd.f32 %v942, %v1070
      %1072 = vmatmul.bf16.gmra.mxu0 %v620
      %v1073 = vpop.f32.mrf.mxu0
      %v1074 = vadd.f32 %v945, %v1073
      %v1075 = vpop.f32.mrf.mxu0
      %v1076 = vadd.f32 %v947, %v1075
      %1077 = vmatmul.bf16.gmra.mxu0 %v623
      %v1078 = vpop.f32.mrf.mxu0
      %v1079 = vadd.f32 %v950, %v1078
      %v1080 = vpop.f32.mrf.mxu0
      %v1081 = vadd.f32 %v952, %v1080
      %1082 = vmatmul.bf16.gmra.mxu0 %v626
      %v1083 = vpop.f32.mrf.mxu0
      %v1084 = vadd.f32 %v955, %v1083
      %v1085 = vpop.f32.mrf.mxu0
      %v1086 = vadd.f32 %v957, %v1085
      %1087 = vmatmul.bf16.gmra.mxu0 %v629
      %v1088 = vpop.f32.mrf.mxu0
      %v1089 = vadd.f32 %v960, %v1088
      %v1090 = vpop.f32.mrf.mxu0
      %v1091 = vadd.f32 %v962, %v1090
      %1092 = vmatmul.bf16.gmra.mxu0 %v632
      %v1093 = vpop.f32.mrf.mxu0
      %v1094 = vadd.f32 %v965, %v1093
      %v1095 = vpop.f32.mrf.mxu0
      %v1096 = vadd.f32 %v967, %v1095
      %1097 = vmatmul.bf16.gmra.mxu0 %v635
      %v1098 = vpop.f32.mrf.mxu0
      %v1099 = vadd.f32 %v970, %v1098
      %v1100 = vpop.f32.mrf.mxu0
      %v1101 = vadd.f32 %v972, %v1100
      %1102 = vmatmul.bf16.gmra.mxu0 %v638
      %v1103 = vpop.f32.mrf.mxu0
      %v1104 = vadd.f32 %v975, %v1103
      %v1105 = vpop.f32.mrf.mxu0
      %v1106 = vadd.f32 %v977, %v1105
      %1107 = vmatmul.bf16.gmra.mxu0 %v641
      %v1108 = vpop.f32.mrf.mxu0
      %v1109 = vadd.f32 %v980, %v1108
      %v1110 = vpop.f32.mrf.mxu0
      %v1111 = vadd.f32 %v982, %v1110
      %1112 = vmatmul.bf16.gmra.mxu0 %v644
      %v1113 = vpop.f32.mrf.mxu0
      %v1114 = vadd.f32 %v985, %v1113
      %v1115 = vpop.f32.mrf.mxu0
      %v1116 = vadd.f32 %v987, %v1115
      %1117 = vmatmul.bf16.gmra.mxu0 %v647
      %v1118 = vpop.f32.mrf.mxu0
      %v1119 = vadd.f32 %v990, %v1118
      %v1120 = vpop.f32.mrf.mxu0
      %v1121 = vadd.f32 %v992, %v1120
      %1122 = vdwg.mxu0
      %1123 = vmatpush.bf16.msra.mxu0 %v840
      %1124 = vmatpush.bf16.msra.mxu0 %v839
      %1125 = vmatpush.bf16.msra.mxu0 %v838
      %1126 = vmatpush.bf16.msra.mxu0 %v837
      %1127 = vmatpush.bf16.msra.mxu0 %v836
      %1128 = vmatpush.bf16.msra.mxu0 %v835
      %1129 = vmatpush.bf16.msra.mxu0 %v834
      %1130 = vmatpush.bf16.msra.mxu0 %v833
      %1131 = vmatmul.bf16.gmra.mxu0 %v579
      %v1132 = vpop.f32.mrf.mxu0
      %v1133 = vadd.f32 %v1004, %v1132
      %v1134 = vpop.f32.mrf.mxu0
      %v1135 = vadd.f32 %v1006, %v1134
      %1136 = vmatmul.bf16.gmra.mxu0 %v582
      %v1137 = vpop.f32.mrf.mxu0
      %v1138 = vadd.f32 %v1009, %v1137
      %v1139 = vpop.f32.mrf.mxu0
      %v1140 = vadd.f32 %v1011, %v1139
      %1141 = vmatmul.bf16.gmra.mxu0 %v585
      %v1142 = vpop.f32.mrf.mxu0
      %v1143 = vadd.f32 %v1014, %v1142
      %v1144 = vpop.f32.mrf.mxu0
      %v1145 = vadd.f32 %v1016, %v1144
      %1146 = vmatmul.bf16.gmra.mxu0 %v588
      %v1147 = vpop.f32.mrf.mxu0
      %v1148 = vadd.f32 %v1019, %v1147
      %v1149 = vpop.f32.mrf.mxu0
      %v1150 = vadd.f32 %v1021, %v1149
      %1151 = vmatmul.bf16.gmra.mxu0 %v591
      %v1152 = vpop.f32.mrf.mxu0
      %v1153 = vadd.f32 %v1024, %v1152
      %v1154 = vpop.f32.mrf.mxu0
      %v1155 = vadd.f32 %v1026, %v1154
      %1156 = vmatmul.bf16.gmra.mxu0 %v594
      %v1157 = vpop.f32.mrf.mxu0
      %v1158 = vadd.f32 %v1029, %v1157
      %v1159 = vpop.f32.mrf.mxu0
      %v1160 = vadd.f32 %v1031, %v1159
      %1161 = vmatmul.bf16.gmra.mxu0 %v597
      %v1162 = vpop.f32.mrf.mxu0
      %v1163 = vadd.f32 %v1034, %v1162
      %v1164 = vpop.f32.mrf.mxu0
      %v1165 = vadd.f32 %v1036, %v1164
      %1166 = vmatmul.bf16.gmra.mxu0 %v600
      %v1167 = vpop.f32.mrf.mxu0
      %v1168 = vadd.f32 %v1039, %v1167
      %v1169 = vpop.f32.mrf.mxu0
      %v1170 = vadd.f32 %v1041, %v1169
      %1171 = vmatmul.bf16.gmra.mxu0 %v603
      %v1172 = vpop.f32.mrf.mxu0
      %v1173 = vadd.f32 %v1044, %v1172
      %v1174 = vpop.f32.mrf.mxu0
      %v1175 = vadd.f32 %v1046, %v1174
      %1176 = vmatmul.bf16.gmra.mxu0 %v606
      %v1177 = vpop.f32.mrf.mxu0
      %v1178 = vadd.f32 %v1049, %v1177
      %v1179 = vpop.f32.mrf.mxu0
      %v1180 = vadd.f32 %v1051, %v1179
      %1181 = vmatmul.bf16.gmra.mxu0 %v609
      %v1182 = vpop.f32.mrf.mxu0
      %v1183 = vadd.f32 %v1054, %v1182
      %v1184 = vpop.f32.mrf.mxu0
      %v1185 = vadd.f32 %v1056, %v1184
      %1186 = vmatmul.bf16.gmra.mxu0 %v612
      %v1187 = vpop.f32.mrf.mxu0
      %v1188 = vadd.f32 %v1059, %v1187
      %v1189 = vpop.f32.mrf.mxu0
      %v1190 = vadd.f32 %v1061, %v1189
      %1191 = vmatmul.bf16.gmra.mxu0 %v615
      %v1192 = vpop.f32.mrf.mxu0
      %v1193 = vadd.f32 %v1064, %v1192
      %v1194 = vpop.f32.mrf.mxu0
      %v1195 = vadd.f32 %v1066, %v1194
      %1196 = vmatmul.bf16.gmra.mxu0 %v618
      %v1197 = vpop.f32.mrf.mxu0
      %v1198 = vadd.f32 %v1069, %v1197
      %v1199 = vpop.f32.mrf.mxu0
      %v1200 = vadd.f32 %v1071, %v1199
      %1201 = vmatmul.bf16.gmra.mxu0 %v621
      %v1202 = vpop.f32.mrf.mxu0
      %v1203 = vadd.f32 %v1074, %v1202
      %v1204 = vpop.f32.mrf.mxu0
      %v1205 = vadd.f32 %v1076, %v1204
      %1206 = vmatmul.bf16.gmra.mxu0 %v624
      %v1207 = vpop.f32.mrf.mxu0
      %v1208 = vadd.f32 %v1079, %v1207
      %v1209 = vpop.f32.mrf.mxu0
      %v1210 = vadd.f32 %v1081, %v1209
      %1211 = vmatmul.bf16.gmra.mxu0 %v627
      %v1212 = vpop.f32.mrf.mxu0
      %v1213 = vadd.f32 %v1084, %v1212
      %v1214 = vpop.f32.mrf.mxu0
      %v1215 = vadd.f32 %v1086, %v1214
      %1216 = vmatmul.bf16.gmra.mxu0 %v630
      %v1217 = vpop.f32.mrf.mxu0
      %v1218 = vadd.f32 %v1089, %v1217
      %v1219 = vpop.f32.mrf.mxu0
      %v1220 = vadd.f32 %v1091, %v1219
      %1221 = vmatmul.bf16.gmra.mxu0 %v633
      %v1222 = vpop.f32.mrf.mxu0
      %v1223 = vadd.f32 %v1094, %v1222
      %v1224 = vpop.f32.mrf.mxu0
      %v1225 = vadd.f32 %v1096, %v1224
      %1226 = vmatmul.bf16.gmra.mxu0 %v636
      %v1227 = vpop.f32.mrf.mxu0
      %v1228 = vadd.f32 %v1099, %v1227
      %v1229 = vpop.f32.mrf.mxu0
      %v1230 = vadd.f32 %v1101, %v1229
      %1231 = vmatmul.bf16.gmra.mxu0 %v639
      %v1232 = vpop.f32.mrf.mxu0
      %v1233 = vadd.f32 %v1104, %v1232
      %v1234 = vpop.f32.mrf.mxu0
      %v1235 = vadd.f32 %v1106, %v1234
      %1236 = vmatmul.bf16.gmra.mxu0 %v642
      %v1237 = vpop.f32.mrf.mxu0
      %v1238 = vadd.f32 %v1109, %v1237
      %v1239 = vpop.f32.mrf.mxu0
      %v1240 = vadd.f32 %v1111, %v1239
      %1241 = vmatmul.bf16.gmra.mxu0 %v645
      %v1242 = vpop.f32.mrf.mxu0
      %v1243 = vadd.f32 %v1114, %v1242
      %v1244 = vpop.f32.mrf.mxu0
      %v1245 = vadd.f32 %v1116, %v1244
      %1246 = vmatmul.bf16.gmra.mxu0 %v648
      %v1247 = vpop.f32.mrf.mxu0
      %v1248 = vadd.f32 %v1119, %v1247
      %v1249 = vpop.f32.mrf.mxu0
      %v1250 = vadd.f32 %v1121, %v1249
      %1251 = vdwg.mxu0
      %v1252 = vadd.f32 %v145, %v1133
      %v1253 = vadd.f32 %v146, %v1135
      %v1254 = vadd.f32 %v147, %v1138
      %v1255 = vadd.f32 %v148, %v1140
      %v1256 = vadd.f32 %v149, %v1143
      %v1257 = vadd.f32 %v150, %v1145
      %v1258 = vadd.f32 %v151, %v1148
      %v1259 = vadd.f32 %v152, %v1150
      %v1260 = vadd.f32 %v153, %v1153
      %v1261 = vadd.f32 %v154, %v1155
      %v1262 = vadd.f32 %v155, %v1158
      %v1263 = vadd.f32 %v156, %v1160
      %v1264 = vadd.f32 %v157, %v1163
      %v1265 = vadd.f32 %v158, %v1165
      %v1266 = vadd.f32 %v159, %v1168
      %v1267 = vadd.f32 %v160, %v1170
      %v1268 = vadd.f32 %v161, %v1173
      %v1269 = vadd.f32 %v162, %v1175
      %v1270 = vadd.f32 %v163, %v1178
      %v1271 = vadd.f32 %v164, %v1180
      %v1272 = vadd.f32 %v165, %v1183
      %v1273 = vadd.f32 %v166, %v1185
      %v1274 = vadd.f32 %v167, %v1188
      %v1275 = vadd.f32 %v168, %v1190
      %v1276 = vadd.f32 %v169, %v1193
      %v1277 = vadd.f32 %v170, %v1195
      %v1278 = vadd.f32 %v171, %v1198
      %v1279 = vadd.f32 %v172, %v1200
      %v1280 = vadd.f32 %v173, %v1203
      %v1281 = vadd.f32 %v174, %v1205
      %v1282 = vadd.f32 %v175, %v1208
      %v1283 = vadd.f32 %v176, %v1210
      %v1284 = vadd.f32 %v177, %v1213
      %v1285 = vadd.f32 %v178, %v1215
      %v1286 = vadd.f32 %v179, %v1218
      %v1287 = vadd.f32 %v180, %v1220
      %v1288 = vadd.f32 %v181, %v1223
      %v1289 = vadd.f32 %v182, %v1225
      %v1290 = vadd.f32 %v183, %v1228
      %v1291 = vadd.f32 %v184, %v1230
      %v1292 = vadd.f32 %v185, %v1233
      %v1293 = vadd.f32 %v186, %v1235
      %v1294 = vadd.f32 %v187, %v1238
      %v1295 = vadd.f32 %v188, %v1240
      %v1296 = vadd.f32 %v189, %v1243
      %v1297 = vadd.f32 %v190, %v1245
      %v1298 = vadd.f32 %v191, %v1248
      %v1299 = vadd.f32 %v192, %v1250
      %1300 = vst [vmem:[#allocation2] sm:$0xff] %v1252
      %1301 = vst [vmem:[#allocation2 + $0x8] sm:$0xff] %v1253
      %1302 = vst [vmem:[#allocation2 + $0x10] sm:$0xff] %v1254
      %1303 = vst [vmem:[#allocation2 + $0x18] sm:$0xff] %v1255
      %1304 = vst [vmem:[#allocation2 + $0x20] sm:$0xff] %v1256
      %1305 = vst [vmem:[#allocation2 + $0x28] sm:$0xff] %v1257
      %1306 = vst [vmem:[#allocation2 + $0x30] sm:$0xff] %v1258
      %1307 = vst [vmem:[#allocation2 + $0x38] sm:$0xff] %v1259
      %1308 = vst [vmem:[#allocation2 + $0x40] sm:$0xff] %v1260
      %1309 = vst [vmem:[#allocation2 + $0x48] sm:$0xff] %v1261
      %1310 = vst [vmem:[#allocation2 + $0x50] sm:$0xff] %v1262
      %1311 = vst [vmem:[#allocation2 + $0x58] sm:$0xff] %v1263
      %1312 = vst [vmem:[#allocation2 + $0x60] sm:$0xff] %v1264
      %1313 = vst [vmem:[#allocation2 + $0x68] sm:$0xff] %v1265
      %1314 = vst [vmem:[#allocation2 + $0x70] sm:$0xff] %v1266
      %1315 = vst [vmem:[#allocation2 + $0x78] sm:$0xff] %v1267
      %1316 = vst [vmem:[#allocation2 + $0x80] sm:$0xff] %v1268
      %1317 = vst [vmem:[#allocation2 + $0x88] sm:$0xff] %v1269
      %1318 = vst [vmem:[#allocation2 + $0x90] sm:$0xff] %v1270
      %1319 = vst [vmem:[#allocation2 + $0x98] sm:$0xff] %v1271
      %1320 = vst [vmem:[#allocation2 + $0xa0] sm:$0xff] %v1272
      %1321 = vst [vmem:[#allocation2 + $0xa8] sm:$0xff] %v1273
      %1322 = vst [vmem:[#allocation2 + $0xb0] sm:$0xff] %v1274
      %1323 = vst [vmem:[#allocation2 + $0xb8] sm:$0xff] %v1275
      %1324 = vst [vmem:[#allocation2 + $0xc0] sm:$0xff] %v1276
      %1325 = vst [vmem:[#allocation2 + $0xc8] sm:$0xff] %v1277
      %1326 = vst [vmem:[#allocation2 + $0xd0] sm:$0xff] %v1278
      %1327 = vst [vmem:[#allocation2 + $0xd8] sm:$0xff] %v1279
      %1328 = vst [vmem:[#allocation2 + $0xe0] sm:$0xff] %v1280
      %1329 = vst [vmem:[#allocation2 + $0xe8] sm:$0xff] %v1281
      %1330 = vst [vmem:[#allocation2 + $0xf0] sm:$0xff] %v1282
      %1331 = vst [vmem:[#allocation2 + $0xf8] sm:$0xff] %v1283
      %1332 = vst [vmem:[#allocation2 + $0x100] sm:$0xff] %v1284
      %1333 = vst [vmem:[#allocation2 + $0x108] sm:$0xff] %v1285
      %1334 = vst [vmem:[#allocation2 + $0x110] sm:$0xff] %v1286
      %1335 = vst [vmem:[#allocation2 + $0x118] sm:$0xff] %v1287
      %1336 = vst [vmem:[#allocation2 + $0x120] sm:$0xff] %v1288
      %1337 = vst [vmem:[#allocation2 + $0x128] sm:$0xff] %v1289
      %1338 = vst [vmem:[#allocation2 + $0x130] sm:$0xff] %v1290
      %1339 = vst [vmem:[#allocation2 + $0x138] sm:$0xff] %v1291
      %1340 = vst [vmem:[#allocation2 + $0x140] sm:$0xff] %v1292
      %1341 = vst [vmem:[#allocation2 + $0x148] sm:$0xff] %v1293
      %1342 = vst [vmem:[#allocation2 + $0x150] sm:$0xff] %v1294
      %1343 = vst [vmem:[#allocation2 + $0x158] sm:$0xff] %v1295
      %1344 = vst [vmem:[#allocation2 + $0x160] sm:$0xff] %v1296
      %1345 = vst [vmem:[#allocation2 + $0x168] sm:$0xff] %v1297
      %1346 = vst [vmem:[#allocation2 + $0x170] sm:$0xff] %v1298
      %1347 = vst [vmem:[#allocation2 + $0x178] sm:$0xff] %v1299
    $region41: #{tpu_custom_call.1} parent=1 // pred_fallthru
      _
    // Predicated region
    $region42: #{tpu_custom_call.1} parent=1 // pred_check
      %p1348 = pneg %p88
    $region43: #{tpu_custom_call.1} parent=1 // pred_check_branch
      %1350 = sbr.rel (%p1348) target = $region45
    $region44: #{tpu_custom_call.1} parent=1 // pred_region
      %v1351 = vld [vmem:[#allocation2] sm:$0xff]
      %v1352 = vld [vmem:[#allocation2 + $0x8] sm:$0xff]
      %v1353 = vld [vmem:[#allocation2 + $0x10] sm:$0xff]
      %v1354 = vld [vmem:[#allocation2 + $0x18] sm:$0xff]
      %v1355 = vld [vmem:[#allocation2 + $0x20] sm:$0xff]
      %v1356 = vld [vmem:[#allocation2 + $0x28] sm:$0xff]
      %v1357 = vld [vmem:[#allocation2 + $0x30] sm:$0xff]
      %v1358 = vld [vmem:[#allocation2 + $0x38] sm:$0xff]
      %v1359 = vld [vmem:[#allocation2 + $0x40] sm:$0xff]
      %v1360 = vld [vmem:[#allocation2 + $0x48] sm:$0xff]
      %v1361 = vld [vmem:[#allocation2 + $0x50] sm:$0xff]
      %v1362 = vld [vmem:[#allocation2 + $0x58] sm:$0xff]
      %v1363 = vld [vmem:[#allocation2 + $0x60] sm:$0xff]
      %v1364 = vld [vmem:[#allocation2 + $0x68] sm:$0xff]
      %v1365 = vld [vmem:[#allocation2 + $0x70] sm:$0xff]
      %v1366 = vld [vmem:[#allocation2 + $0x78] sm:$0xff]
      %v1367 = vld [vmem:[#allocation2 + $0x80] sm:$0xff]
      %v1368 = vld [vmem:[#allocation2 + $0x88] sm:$0xff]
      %v1369 = vld [vmem:[#allocation2 + $0x90] sm:$0xff]
      %v1370 = vld [vmem:[#allocation2 + $0x98] sm:$0xff]
      %v1371 = vld [vmem:[#allocation2 + $0xa0] sm:$0xff]
      %v1372 = vld [vmem:[#allocation2 + $0xa8] sm:$0xff]
      %v1373 = vld [vmem:[#allocation2 + $0xb0] sm:$0xff]
      %v1374 = vld [vmem:[#allocation2 + $0xb8] sm:$0xff]
      %v1375 = vld [vmem:[#allocation2 + $0xc0] sm:$0xff]
      %v1376 = vld [vmem:[#allocation2 + $0xc8] sm:$0xff]
      %v1377 = vld [vmem:[#allocation2 + $0xd0] sm:$0xff]
      %v1378 = vld [vmem:[#allocation2 + $0xd8] sm:$0xff]
      %v1379 = vld [vmem:[#allocation2 + $0xe0] sm:$0xff]
      %v1380 = vld [vmem:[#allocation2 + $0xe8] sm:$0xff]
      %v1381 = vld [vmem:[#allocation2 + $0xf0] sm:$0xff]
      %v1382 = vld [vmem:[#allocation2 + $0xf8] sm:$0xff]
      %v1383 = vld [vmem:[#allocation2 + $0x100] sm:$0xff]
      %v1384 = vld [vmem:[#allocation2 + $0x108] sm:$0xff]
      %v1385 = vld [vmem:[#allocation2 + $0x110] sm:$0xff]
      %v1386 = vld [vmem:[#allocation2 + $0x118] sm:$0xff]
      %v1387 = vld [vmem:[#allocation2 + $0x120] sm:$0xff]
      %v1388 = vld [vmem:[#allocation2 + $0x128] sm:$0xff]
      %v1389 = vld [vmem:[#allocation2 + $0x130] sm:$0xff]
      %v1390 = vld [vmem:[#allocation2 + $0x138] sm:$0xff]
      %v1391 = vld [vmem:[#allocation2 + $0x140] sm:$0xff]
      %v1392 = vld [vmem:[#allocation2 + $0x148] sm:$0xff]
      %v1393 = vld [vmem:[#allocation2 + $0x150] sm:$0xff]
      %v1394 = vld [vmem:[#allocation2 + $0x158] sm:$0xff]
      %v1395 = vld [vmem:[#allocation2 + $0x160] sm:$0xff]
      %v1396 = vld [vmem:[#allocation2 + $0x168] sm:$0xff]
      %v1397 = vld [vmem:[#allocation2 + $0x170] sm:$0xff]
      %v1398 = vld [vmem:[#allocation2 + $0x178] sm:$0xff]
      %v1399 = vld [vmem:[#allocation11] sm:$0xf]
      %v1400 = vld [vmem:[#allocation11 + $0x4] sm:$0xf]
      %v1401 = vld [vmem:[#allocation11 + $0x8] sm:$0xf]
      %v1402 = vld [vmem:[#allocation11 + $0xc] sm:$0xf]
      %v1403 = vld [vmem:[#allocation11 + $0x10] sm:$0xf]
      %v1404 = vld [vmem:[#allocation11 + $0x14] sm:$0xf]
      %v1405 = vld [vmem:[#allocation11 + $0x18] sm:$0xf]
      %v1406 = vld [vmem:[#allocation11 + $0x1c] sm:$0xf]
      %v1407 = vld [vmem:[#allocation11 + $0x20] sm:$0xf]
      %v1408 = vld [vmem:[#allocation11 + $0x24] sm:$0xf]
      %v1409 = vld [vmem:[#allocation11 + $0x28] sm:$0xf]
      %v1410 = vld [vmem:[#allocation11 + $0x2c] sm:$0xf]
      %v1411 = vld [vmem:[#allocation11 + $0x30] sm:$0xf]
      %v1412 = vld [vmem:[#allocation11 + $0x34] sm:$0xf]
      %v1413 = vld [vmem:[#allocation11 + $0x38] sm:$0xf]
      %v1414 = vld [vmem:[#allocation11 + $0x3c] sm:$0xf]
      %v1415 = vunpack.c.l.bf16 %v1399
      %v1416 = vunpack.c.l.bf16 %v1400
      %v1417 = vunpack.c.l.bf16 %v1401
      %v1418 = vunpack.c.l.bf16 %v1402
      %v1419 = vunpack.c.l.bf16 %v1403
      %v1420 = vunpack.c.l.bf16 %v1404
      %v1421 = vunpack.c.l.bf16 %v1405
      %v1422 = vunpack.c.l.bf16 %v1406
      %v1423 = vunpack.c.l.bf16 %v1407
      %v1424 = vunpack.c.l.bf16 %v1408
      %v1425 = vunpack.c.l.bf16 %v1409
      %v1426 = vunpack.c.l.bf16 %v1410
      %v1427 = vunpack.c.l.bf16 %v1411
      %v1428 = vunpack.c.l.bf16 %v1412
      %v1429 = vunpack.c.l.bf16 %v1413
      %v1430 = vunpack.c.l.bf16 %v1414
      %1431 = vmatpush.msra.mxu0 %v1430
      %1432 = vmatpush.msra.mxu0 %v1429
      %1433 = vmatpush.msra.mxu0 %v1428
      %1434 = vmatpush.msra.mxu0 %v1427
      %1435 = vmatpush.msra.mxu0 %v1426
      %1436 = vmatpush.msra.mxu0 %v1425
      %1437 = vmatpush.msra.mxu0 %v1424
      %1438 = vmatpush.msra.mxu0 %v1423
      %1439 = vmatpush.msra.mxu0 %v1422
      %1440 = vmatpush.msra.mxu0 %v1421
      %1441 = vmatpush.msra.mxu0 %v1420
      %1442 = vmatpush.msra.mxu0 %v1419
      %1443 = vmatpush.msra.mxu0 %v1418
      %1444 = vmatpush.msra.mxu0 %v1417
      %1445 = vmatpush.msra.mxu0 %v1416
      %1446 = vmatpush.msra.mxu0 %v1415
      %1447 = vmatmul.f32.gmra.mxu0 %v1351
      %v1448 = vpop.f32.mrf.mxu0
      %v1449 = vadd.f32 0.0, %v1448
      %1450 = vmatmul.f32.gmra.mxu0 %v1352
      %v1451 = vpop.f32.mrf.mxu0
      %v1452 = vadd.f32 0.0, %v1451
      %1453 = vmatmul.f32.gmra.mxu0 %v1353
      %v1454 = vpop.f32.mrf.mxu0
      %v1455 = vadd.f32 0.0, %v1454
      %1456 = vmatmul.f32.gmra.mxu0 %v1354
      %v1457 = vpop.f32.mrf.mxu0
      %v1458 = vadd.f32 0.0, %v1457
      %1459 = vmatmul.f32.gmra.mxu0 %v1355
      %v1460 = vpop.f32.mrf.mxu0
      %v1461 = vadd.f32 0.0, %v1460
      %1462 = vmatmul.f32.gmra.mxu0 %v1356
      %v1463 = vpop.f32.mrf.mxu0
      %v1464 = vadd.f32 0.0, %v1463
      %1465 = vmatmul.f32.gmra.mxu0 %v1357
      %v1466 = vpop.f32.mrf.mxu0
      %v1467 = vadd.f32 0.0, %v1466
      %1468 = vmatmul.f32.gmra.mxu0 %v1358
      %v1469 = vpop.f32.mrf.mxu0
      %v1470 = vadd.f32 0.0, %v1469
      %1471 = vmatmul.f32.gmra.mxu0 %v1359
      %v1472 = vpop.f32.mrf.mxu0
      %v1473 = vadd.f32 0.0, %v1472
      %1474 = vmatmul.f32.gmra.mxu0 %v1360
      %v1475 = vpop.f32.mrf.mxu0
      %v1476 = vadd.f32 0.0, %v1475
      %1477 = vmatmul.f32.gmra.mxu0 %v1361
      %v1478 = vpop.f32.mrf.mxu0
      %v1479 = vadd.f32 0.0, %v1478
      %1480 = vmatmul.f32.gmra.mxu0 %v1362
      %v1481 = vpop.f32.mrf.mxu0
      %v1482 = vadd.f32 0.0, %v1481
      %1483 = vmatmul.f32.gmra.mxu0 %v1363
      %v1484 = vpop.f32.mrf.mxu0
      %v1485 = vadd.f32 0.0, %v1484
      %1486 = vmatmul.f32.gmra.mxu0 %v1364
      %v1487 = vpop.f32.mrf.mxu0
      %v1488 = vadd.f32 0.0, %v1487
      %1489 = vmatmul.f32.gmra.mxu0 %v1365
      %v1490 = vpop.f32.mrf.mxu0
      %v1491 = vadd.f32 0.0, %v1490
      %1492 = vmatmul.f32.gmra.mxu0 %v1366
      %v1493 = vpop.f32.mrf.mxu0
      %v1494 = vadd.f32 0.0, %v1493
      %1495 = vmatmul.f32.gmra.mxu0 %v1367
      %v1496 = vpop.f32.mrf.mxu0
      %v1497 = vadd.f32 0.0, %v1496
      %1498 = vmatmul.f32.gmra.mxu0 %v1368
      %v1499 = vpop.f32.mrf.mxu0
      %v1500 = vadd.f32 0.0, %v1499
      %1501 = vmatmul.f32.gmra.mxu0 %v1369
      %v1502 = vpop.f32.mrf.mxu0
      %v1503 = vadd.f32 0.0, %v1502
      %1504 = vmatmul.f32.gmra.mxu0 %v1370
      %v1505 = vpop.f32.mrf.mxu0
      %v1506 = vadd.f32 0.0, %v1505
      %1507 = vmatmul.f32.gmra.mxu0 %v1371
      %v1508 = vpop.f32.mrf.mxu0
      %v1509 = vadd.f32 0.0, %v1508
      %1510 = vmatmul.f32.gmra.mxu0 %v1372
      %v1511 = vpop.f32.mrf.mxu0
      %v1512 = vadd.f32 0.0, %v1511
      %1513 = vmatmul.f32.gmra.mxu0 %v1373
      %v1514 = vpop.f32.mrf.mxu0
      %v1515 = vadd.f32 0.0, %v1514
      %1516 = vmatmul.f32.gmra.mxu0 %v1374
      %v1517 = vpop.f32.mrf.mxu0
      %v1518 = vadd.f32 0.0, %v1517
      %1519 = vmatmul.f32.gmra.mxu0 %v1375
      %v1520 = vpop.f32.mrf.mxu0
      %v1521 = vadd.f32 0.0, %v1520
      %1522 = vmatmul.f32.gmra.mxu0 %v1376
      %v1523 = vpop.f32.mrf.mxu0
      %v1524 = vadd.f32 0.0, %v1523
      %1525 = vmatmul.f32.gmra.mxu0 %v1377
      %v1526 = vpop.f32.mrf.mxu0
      %v1527 = vadd.f32 0.0, %v1526
      %1528 = vmatmul.f32.gmra.mxu0 %v1378
      %v1529 = vpop.f32.mrf.mxu0
      %v1530 = vadd.f32 0.0, %v1529
      %1531 = vmatmul.f32.gmra.mxu0 %v1379
      %v1532 = vpop.f32.mrf.mxu0
      %v1533 = vadd.f32 0.0, %v1532
      %1534 = vmatmul.f32.gmra.mxu0 %v1380
      %v1535 = vpop.f32.mrf.mxu0
      %v1536 = vadd.f32 0.0, %v1535
      %1537 = vmatmul.f32.gmra.mxu0 %v1381
      %v1538 = vpop.f32.mrf.mxu0
      %v1539 = vadd.f32 0.0, %v1538
      %1540 = vmatmul.f32.gmra.mxu0 %v1382
      %v1541 = vpop.f32.mrf.mxu0
      %v1542 = vadd.f32 0.0, %v1541
      %1543 = vmatmul.f32.gmra.mxu0 %v1383
      %v1544 = vpop.f32.mrf.mxu0
      %v1545 = vadd.f32 0.0, %v1544
      %1546 = vmatmul.f32.gmra.mxu0 %v1384
      %v1547 = vpop.f32.mrf.mxu0
      %v1548 = vadd.f32 0.0, %v1547
      %1549 = vmatmul.f32.gmra.mxu0 %v1385
      %v1550 = vpop.f32.mrf.mxu0
      %v1551 = vadd.f32 0.0, %v1550
      %1552 = vmatmul.f32.gmra.mxu0 %v1386
      %v1553 = vpop.f32.mrf.mxu0
      %v1554 = vadd.f32 0.0, %v1553
      %1555 = vmatmul.f32.gmra.mxu0 %v1387
      %v1556 = vpop.f32.mrf.mxu0
      %v1557 = vadd.f32 0.0, %v1556
      %1558 = vmatmul.f32.gmra.mxu0 %v1388
      %v1559 = vpop.f32.mrf.mxu0
      %v1560 = vadd.f32 0.0, %v1559
      %1561 = vmatmul.f32.gmra.mxu0 %v1389
      %v1562 = vpop.f32.mrf.mxu0
      %v1563 = vadd.f32 0.0, %v1562
      %1564 = vmatmul.f32.gmra.mxu0 %v1390
      %v1565 = vpop.f32.mrf.mxu0
      %v1566 = vadd.f32 0.0, %v1565
      %1567 = vmatmul.f32.gmra.mxu0 %v1391
      %v1568 = vpop.f32.mrf.mxu0
      %v1569 = vadd.f32 0.0, %v1568
      %1570 = vmatmul.f32.gmra.mxu0 %v1392
      %v1571 = vpop.f32.mrf.mxu0
      %v1572 = vadd.f32 0.0, %v1571
      %1573 = vmatmul.f32.gmra.mxu0 %v1393
      %v1574 = vpop.f32.mrf.mxu0
      %v1575 = vadd.f32 0.0, %v1574
      %1576 = vmatmul.f32.gmra.mxu0 %v1394
      %v1577 = vpop.f32.mrf.mxu0
      %v1578 = vadd.f32 0.0, %v1577
      %1579 = vmatmul.f32.gmra.mxu0 %v1395
      %v1580 = vpop.f32.mrf.mxu0
      %v1581 = vadd.f32 0.0, %v1580
      %1582 = vmatmul.f32.gmra.mxu0 %v1396
      %v1583 = vpop.f32.mrf.mxu0
      %v1584 = vadd.f32 0.0, %v1583
      %1585 = vmatmul.f32.gmra.mxu0 %v1397
      %v1586 = vpop.f32.mrf.mxu0
      %v1587 = vadd.f32 0.0, %v1586
      %1588 = vmatmul.f32.gmra.mxu0 %v1398
      %v1589 = vpop.f32.mrf.mxu0
      %v1590 = vadd.f32 0.0, %v1589
      %1591 = vdwg.mxu0
      %v1592 = vld [vmem:[%s5] sm:$0x1]
      %v1594 = vperm.slane %v1592, 0
      %v1596 = vmul.f32 %v1449, %v1594
      %v1597 = vmul.f32 %v1452, %v1594
      %v1598 = vmul.f32 %v1455, %v1594
      %v1599 = vmul.f32 %v1458, %v1594
      %v1600 = vmul.f32 %v1461, %v1594
      %v1601 = vmul.f32 %v1464, %v1594
      %v1602 = vmul.f32 %v1467, %v1594
      %v1603 = vmul.f32 %v1470, %v1594
      %v1604 = vmul.f32 %v1473, %v1594
      %v1605 = vmul.f32 %v1476, %v1594
      %v1606 = vmul.f32 %v1479, %v1594
      %v1607 = vmul.f32 %v1482, %v1594
      %v1608 = vmul.f32 %v1485, %v1594
      %v1609 = vmul.f32 %v1488, %v1594
      %v1610 = vmul.f32 %v1491, %v1594
      %v1611 = vmul.f32 %v1494, %v1594
      %v1612 = vmul.f32 %v1497, %v1594
      %v1613 = vmul.f32 %v1500, %v1594
      %v1614 = vmul.f32 %v1503, %v1594
      %v1615 = vmul.f32 %v1506, %v1594
      %v1616 = vmul.f32 %v1509, %v1594
      %v1617 = vmul.f32 %v1512, %v1594
      %v1618 = vmul.f32 %v1515, %v1594
      %v1619 = vmul.f32 %v1518, %v1594
      %v1620 = vmul.f32 %v1521, %v1594
      %v1621 = vmul.f32 %v1524, %v1594
      %v1622 = vmul.f32 %v1527, %v1594
      %v1623 = vmul.f32 %v1530, %v1594
      %v1624 = vmul.f32 %v1533, %v1594
      %v1625 = vmul.f32 %v1536, %v1594
      %v1626 = vmul.f32 %v1539, %v1594
      %v1627 = vmul.f32 %v1542, %v1594
      %v1628 = vmul.f32 %v1545, %v1594
      %v1629 = vmul.f32 %v1548, %v1594
      %v1630 = vmul.f32 %v1551, %v1594
      %v1631 = vmul.f32 %v1554, %v1594
      %v1632 = vmul.f32 %v1557, %v1594
      %v1633 = vmul.f32 %v1560, %v1594
      %v1634 = vmul.f32 %v1563, %v1594
      %v1635 = vmul.f32 %v1566, %v1594
      %v1636 = vmul.f32 %v1569, %v1594
      %v1637 = vmul.f32 %v1572, %v1594
      %v1638 = vmul.f32 %v1575, %v1594
      %v1639 = vmul.f32 %v1578, %v1594
      %v1640 = vmul.f32 %v1581, %v1594
      %v1641 = vmul.f32 %v1584, %v1594
      %v1642 = vmul.f32 %v1587, %v1594
      %v1643 = vmul.f32 %v1590, %v1594
      %v1644 = vld [vmem:[%s6] sm:$0x1]
      %v1646 = vperm.slane %v1644, 0
      %v1648 = vadd.f32 %v1596, %v1646
      %v1649 = vadd.f32 %v1597, %v1646
      %v1650 = vadd.f32 %v1598, %v1646
      %v1651 = vadd.f32 %v1599, %v1646
      %v1652 = vadd.f32 %v1600, %v1646
      %v1653 = vadd.f32 %v1601, %v1646
      %v1654 = vadd.f32 %v1602, %v1646
      %v1655 = vadd.f32 %v1603, %v1646
      %v1656 = vadd.f32 %v1604, %v1646
      %v1657 = vadd.f32 %v1605, %v1646
      %v1658 = vadd.f32 %v1606, %v1646
      %v1659 = vadd.f32 %v1607, %v1646
      %v1660 = vadd.f32 %v1608, %v1646
      %v1661 = vadd.f32 %v1609, %v1646
      %v1662 = vadd.f32 %v1610, %v1646
      %v1663 = vadd.f32 %v1611, %v1646
      %v1664 = vadd.f32 %v1612, %v1646
      %v1665 = vadd.f32 %v1613, %v1646
      %v1666 = vadd.f32 %v1614, %v1646
      %v1667 = vadd.f32 %v1615, %v1646
      %v1668 = vadd.f32 %v1616, %v1646
      %v1669 = vadd.f32 %v1617, %v1646
      %v1670 = vadd.f32 %v1618, %v1646
      %v1671 = vadd.f32 %v1619, %v1646
      %v1672 = vadd.f32 %v1620, %v1646
      %v1673 = vadd.f32 %v1621, %v1646
      %v1674 = vadd.f32 %v1622, %v1646
      %v1675 = vadd.f32 %v1623, %v1646
      %v1676 = vadd.f32 %v1624, %v1646
      %v1677 = vadd.f32 %v1625, %v1646
      %v1678 = vadd.f32 %v1626, %v1646
      %v1679 = vadd.f32 %v1627, %v1646
      %v1680 = vadd.f32 %v1628, %v1646
      %v1681 = vadd.f32 %v1629, %v1646
      %v1682 = vadd.f32 %v1630, %v1646
      %v1683 = vadd.f32 %v1631, %v1646
      %v1684 = vadd.f32 %v1632, %v1646
      %v1685 = vadd.f32 %v1633, %v1646
      %v1686 = vadd.f32 %v1634, %v1646
      %v1687 = vadd.f32 %v1635, %v1646
      %v1688 = vadd.f32 %v1636, %v1646
      %v1689 = vadd.f32 %v1637, %v1646
      %v1690 = vadd.f32 %v1638, %v1646
      %v1691 = vadd.f32 %v1639, %v1646
      %v1692 = vadd.f32 %v1640, %v1646
      %v1693 = vadd.f32 %v1641, %v1646
      %v1694 = vadd.f32 %v1642, %v1646
      %v1695 = vadd.f32 %v1643, %v1646
      %v1696 = vmax.f32 %v1648, 0.0
      %v1697 = vmax.f32 %v1649, 0.0
      %v1698 = vmax.f32 %v1650, 0.0
      %v1699 = vmax.f32 %v1651, 0.0
      %v1700 = vmax.f32 %v1652, 0.0
      %v1701 = vmax.f32 %v1653, 0.0
      %v1702 = vmax.f32 %v1654, 0.0
      %v1703 = vmax.f32 %v1655, 0.0
      %v1704 = vmax.f32 %v1656, 0.0
      %v1705 = vmax.f32 %v1657, 0.0
      %v1706 = vmax.f32 %v1658, 0.0
      %v1707 = vmax.f32 %v1659, 0.0
      %v1708 = vmax.f32 %v1660, 0.0
      %v1709 = vmax.f32 %v1661, 0.0
      %v1710 = vmax.f32 %v1662, 0.0
      %v1711 = vmax.f32 %v1663, 0.0
      %v1712 = vmax.f32 %v1664, 0.0
      %v1713 = vmax.f32 %v1665, 0.0
      %v1714 = vmax.f32 %v1666, 0.0
      %v1715 = vmax.f32 %v1667, 0.0
      %v1716 = vmax.f32 %v1668, 0.0
      %v1717 = vmax.f32 %v1669, 0.0
      %v1718 = vmax.f32 %v1670, 0.0
      %v1719 = vmax.f32 %v1671, 0.0
      %v1720 = vmax.f32 %v1672, 0.0
      %v1721 = vmax.f32 %v1673, 0.0
      %v1722 = vmax.f32 %v1674, 0.0
      %v1723 = vmax.f32 %v1675, 0.0
      %v1724 = vmax.f32 %v1676, 0.0
      %v1725 = vmax.f32 %v1677, 0.0
      %v1726 = vmax.f32 %v1678, 0.0
      %v1727 = vmax.f32 %v1679, 0.0
      %v1728 = vmax.f32 %v1680, 0.0
      %v1729 = vmax.f32 %v1681, 0.0
      %v1730 = vmax.f32 %v1682, 0.0
      %v1731 = vmax.f32 %v1683, 0.0
      %v1732 = vmax.f32 %v1684, 0.0
      %v1733 = vmax.f32 %v1685, 0.0
      %v1734 = vmax.f32 %v1686, 0.0
      %v1735 = vmax.f32 %v1687, 0.0
      %v1736 = vmax.f32 %v1688, 0.0
      %v1737 = vmax.f32 %v1689, 0.0
      %v1738 = vmax.f32 %v1690, 0.0
      %v1739 = vmax.f32 %v1691, 0.0
      %v1740 = vmax.f32 %v1692, 0.0
      %v1741 = vmax.f32 %v1693, 0.0
      %v1742 = vmax.f32 %v1694, 0.0
      %v1743 = vmax.f32 %v1695, 0.0
      %v1744 = vpack.c.bf16 %v1696, %v1696
      %v1745 = vpack.c.bf16 %v1697, %v1697
      %v1746 = vpack.c.bf16 %v1698, %v1698
      %v1747 = vpack.c.bf16 %v1699, %v1699
      %v1748 = vpack.c.bf16 %v1700, %v1700
      %v1749 = vpack.c.bf16 %v1701, %v1701
      %v1750 = vpack.c.bf16 %v1702, %v1702
      %v1751 = vpack.c.bf16 %v1703, %v1703
      %v1752 = vpack.c.bf16 %v1704, %v1704
      %v1753 = vpack.c.bf16 %v1705, %v1705
      %v1754 = vpack.c.bf16 %v1706, %v1706
      %v1755 = vpack.c.bf16 %v1707, %v1707
      %v1756 = vpack.c.bf16 %v1708, %v1708
      %v1757 = vpack.c.bf16 %v1709, %v1709
      %v1758 = vpack.c.bf16 %v1710, %v1710
      %v1759 = vpack.c.bf16 %v1711, %v1711
      %v1760 = vpack.c.bf16 %v1712, %v1712
      %v1761 = vpack.c.bf16 %v1713, %v1713
      %v1762 = vpack.c.bf16 %v1714, %v1714
      %v1763 = vpack.c.bf16 %v1715, %v1715
      %v1764 = vpack.c.bf16 %v1716, %v1716
      %v1765 = vpack.c.bf16 %v1717, %v1717
      %v1766 = vpack.c.bf16 %v1718, %v1718
      %v1767 = vpack.c.bf16 %v1719, %v1719
      %v1768 = vpack.c.bf16 %v1720, %v1720
      %v1769 = vpack.c.bf16 %v1721, %v1721
      %v1770 = vpack.c.bf16 %v1722, %v1722
      %v1771 = vpack.c.bf16 %v1723, %v1723
      %v1772 = vpack.c.bf16 %v1724, %v1724
      %v1773 = vpack.c.bf16 %v1725, %v1725
      %v1774 = vpack.c.bf16 %v1726, %v1726
      %v1775 = vpack.c.bf16 %v1727, %v1727
      %v1776 = vpack.c.bf16 %v1728, %v1728
      %v1777 = vpack.c.bf16 %v1729, %v1729
      %v1778 = vpack.c.bf16 %v1730, %v1730
      %v1779 = vpack.c.bf16 %v1731, %v1731
      %v1780 = vpack.c.bf16 %v1732, %v1732
      %v1781 = vpack.c.bf16 %v1733, %v1733
      %v1782 = vpack.c.bf16 %v1734, %v1734
      %v1783 = vpack.c.bf16 %v1735, %v1735
      %v1784 = vpack.c.bf16 %v1736, %v1736
      %v1785 = vpack.c.bf16 %v1737, %v1737
      %v1786 = vpack.c.bf16 %v1738, %v1738
      %v1787 = vpack.c.bf16 %v1739, %v1739
      %v1788 = vpack.c.bf16 %v1740, %v1740
      %v1789 = vpack.c.bf16 %v1741, %v1741
      %v1790 = vpack.c.bf16 %v1742, %v1742
      %v1791 = vpack.c.bf16 %v1743, %v1743
      %1792 = vst [vmem:[#allocation12] sm:$0xf] %v1744
      %1793 = vst [vmem:[#allocation12 + $0x4] sm:$0xf] %v1745
      %1794 = vst [vmem:[#allocation12 + $0x8] sm:$0xf] %v1746
      %1795 = vst [vmem:[#allocation12 + $0xc] sm:$0xf] %v1747
      %1796 = vst [vmem:[#allocation12 + $0x10] sm:$0xf] %v1748
      %1797 = vst [vmem:[#allocation12 + $0x14] sm:$0xf] %v1749
      %1798 = vst [vmem:[#allocation12 + $0x18] sm:$0xf] %v1750
      %1799 = vst [vmem:[#allocation12 + $0x1c] sm:$0xf] %v1751
      %1800 = vst [vmem:[#allocation12 + $0x20] sm:$0xf] %v1752
      %1801 = vst [vmem:[#allocation12 + $0x24] sm:$0xf] %v1753
      %1802 = vst [vmem:[#allocation12 + $0x28] sm:$0xf] %v1754
      %1803 = vst [vmem:[#allocation12 + $0x2c] sm:$0xf] %v1755
      %1804 = vst [vmem:[#allocation12 + $0x30] sm:$0xf] %v1756
      %1805 = vst [vmem:[#allocation12 + $0x34] sm:$0xf] %v1757
      %1806 = vst [vmem:[#allocation12 + $0x38] sm:$0xf] %v1758
      %1807 = vst [vmem:[#allocation12 + $0x3c] sm:$0xf] %v1759
      %1808 = vst [vmem:[#allocation12 + $0x40] sm:$0xf] %v1760
      %1809 = vst [vmem:[#allocation12 + $0x44] sm:$0xf] %v1761
      %1810 = vst [vmem:[#allocation12 + $0x48] sm:$0xf] %v1762
      %1811 = vst [vmem:[#allocation12 + $0x4c] sm:$0xf] %v1763
      %1812 = vst [vmem:[#allocation12 + $0x50] sm:$0xf] %v1764
      %1813 = vst [vmem:[#allocation12 + $0x54] sm:$0xf] %v1765
      %1814 = vst [vmem:[#allocation12 + $0x58] sm:$0xf] %v1766
      %1815 = vst [vmem:[#allocation12 + $0x5c] sm:$0xf] %v1767
      %1816 = vst [vmem:[#allocation12 + $0x60] sm:$0xf] %v1768
      %1817 = vst [vmem:[#allocation12 + $0x64] sm:$0xf] %v1769
      %1818 = vst [vmem:[#allocation12 + $0x68] sm:$0xf] %v1770
      %1819 = vst [vmem:[#allocation12 + $0x6c] sm:$0xf] %v1771
      %1820 = vst [vmem:[#allocation12 + $0x70] sm:$0xf] %v1772
      %1821 = vst [vmem:[#allocation12 + $0x74] sm:$0xf] %v1773
      %1822 = vst [vmem:[#allocation12 + $0x78] sm:$0xf] %v1774
      %1823 = vst [vmem:[#allocation12 + $0x7c] sm:$0xf] %v1775
      %1824 = vst [vmem:[#allocation12 + $0x80] sm:$0xf] %v1776
      %1825 = vst [vmem:[#allocation12 + $0x84] sm:$0xf] %v1777
      %1826 = vst [vmem:[#allocation12 + $0x88] sm:$0xf] %v1778
      %1827 = vst [vmem:[#allocation12 + $0x8c] sm:$0xf] %v1779
      %1828 = vst [vmem:[#allocation12 + $0x90] sm:$0xf] %v1780
      %1829 = vst [vmem:[#allocation12 + $0x94] sm:$0xf] %v1781
      %1830 = vst [vmem:[#allocation12 + $0x98] sm:$0xf] %v1782
      %1831 = vst [vmem:[#allocation12 + $0x9c] sm:$0xf] %v1783
      %1832 = vst [vmem:[#allocation12 + $0xa0] sm:$0xf] %v1784
      %1833 = vst [vmem:[#allocation12 + $0xa4] sm:$0xf] %v1785
      %1834 = vst [vmem:[#allocation12 + $0xa8] sm:$0xf] %v1786
      %1835 = vst [vmem:[#allocation12 + $0xac] sm:$0xf] %v1787
      %1836 = vst [vmem:[#allocation12 + $0xb0] sm:$0xf] %v1788
      %1837 = vst [vmem:[#allocation12 + $0xb4] sm:$0xf] %v1789
      %1838 = vst [vmem:[#allocation12 + $0xb8] sm:$0xf] %v1790
      %1839 = vst [vmem:[#allocation12 + $0xbc] sm:$0xf] %v1791
    $region45: #{tpu_custom_call.1} parent=1 // pred_fallthru
      _
    // Predicated region
    $region46: #{tpu_custom_call.1} parent=1 // pred_check
      _
    $region47: #{tpu_custom_call.1} parent=1 // pred_check_branch
      %1841 = sbr.rel (0) target = $region49
    $region48: #{tpu_custom_call.1} parent=1 // pred_region
      %1843 = vsyncadd [#allocation8], 0
      %s1844 = sshll.u32 [#allocation12], 4
      %s1845 = int_to_ptr.vmem [resolvable:$true] %s1844
      %s1846 = sshll.u32 %s7, 4
      %s1847 = int_to_ptr.hbm [resolvable:$true] %s1846
      %1852 = dma.vmem_to_hbm [thread:$0]  %s1845, 3072, %s1847, [#allocation8], 64, 64, 4
    $region49: #{tpu_custom_call.1} parent=1 // pred_fallthru
      _
    // Predicated region
    $region50: #{tpu_custom_call.1} parent=1 // pred_check
      _
    $region51: #{tpu_custom_call.1} parent=1 // pred_check_branch
      %1854 = sbr.rel (0) target = $region53
    $region52: #{tpu_custom_call.1} parent=1 // pred_region
      %1856 = dma.done [#allocation8], 3072
    $region53: #{tpu_custom_call.1} parent=1 // pred_fallthru
      _
    %1857 = vsyncpa [#allocation7], 1
    %1858 = vsyncpa [#allocation10], 1
    %1859 = vsyncpa [#allocation8], 1

</llo_original>
